<compile_context>
chip_gen: v5e
topology: v5e:2x2
jax: 0.10.0
libtpu: 0.0.40
codegen_flags: <defaults>
</compile_context>

<pallas_src>
import functools

import jax
import jax.numpy as jnp
import numpy as np
from jax.experimental import pallas as pl
from jax.experimental.pallas import tpu as pltpu


def _downsampler_kernel(xt_ref, wk_ref, bconv_ref, spool_ref, bpool_ref, o_ref,
                        *, cin, cconv, th, wop):
    # xt_ref:   [1, 1, 6, Cin, (TH+1)*WoP]  six flat stride-2 column-sets of this tile
    #           (combo c6 = (row_parity)*3 + kx; local row l, col ow at l*WoP + ow)
    # wk_ref:   [9, Cconv, Cin]             per-tap conv weights, BN scale folded in
    # bconv_ref:[Cconv, 1]  spool_ref/bpool_ref: [Cin, 1]
    # o_ref:    [1, Cout, TH*WoP]           flat output rows (conv ++ pool channels)
    nflat = th * wop
    acc = None          # f32 conv accumulator [Cconv, TH*WoP]
    pool = None         # running max of the 4 pool taps [Cin, TH*WoP]
    for ky in range(3):
        par, dy = ky % 2, ky // 2
        for kx in range(3):
            c6 = par * 3 + kx
            # contiguous, lane-aligned slab (dy*WoP is a multiple of 128)
            tap = xt_ref[0, 0, c6, :, dy * wop: dy * wop + nflat]    # [Cin, TH*WoP]
            w = wk_ref[3 * ky + kx]                                   # [Cconv, Cin]
            contrib = jnp.dot(w, tap, preferred_element_type=jnp.float32)
            acc = contrib if acc is None else acc + contrib
            # the (ky,kx) in {1,2}x{1,2} taps are exactly the 2x2 max-pool operands
            if ky >= 1 and kx >= 1:
                pool = tap if pool is None else jnp.maximum(pool, tap)

    conv_out = jnp.maximum(acc + bconv_ref[...], 0.0)                       # [Cconv, F]
    pool_out = jnp.maximum(pool.astype(jnp.float32) * spool_ref[...]
                           + bpool_ref[...], 0.0)                           # [Cin, F]
    o_ref[0, 0:cconv, :] = conv_out.astype(o_ref.dtype)
    o_ref[0, cconv:cconv + cin, :] = pool_out.astype(o_ref.dtype)


def _pick_tile_h(ho, wop, cin, cout, itemsize, budget_bytes):
    """Largest TH whose double-buffered blocks + f32 temporaries fit the budget."""
    best = 1
    for th in range(1, ho + 1):
        in_blk = 6 * cin * (th + 1) * wop * itemsize
        out_blk = cout * th * wop * itemsize
        f32_tmp = cout * th * wop * 4
        need = 2 * (in_blk + out_blk) + 2 * f32_tmp
        if th == 1 or need <= budget_bytes:
            best = th
        else:
            break
    return best


@functools.partial(jax.jit, static_argnames=("eps", "tile_h"))
def downsampler_block_forward(x, conv_w, conv_b, gamma, beta, mean, var,
                              eps=1e-3, tile_h=None):
    """x: [N, Cin, H, W] -> [N, Cout, ceil(H/2), ceil(W/2)]  (NCHW, like PyTorch)."""
    N, Cin, H, W = x.shape
    Cconv = conv_w.shape[0]
    Cout = Cconv + Cin
    Ho, Wo = (H + 1) // 2, (W + 1) // 2        # conv output size (k=3, s=2, p=1)
    Hp, Wp = H // 2, W // 2                    # maxpool output size

    # lane-dense flat row width (multiple of 128) -> aligned slabs + unmasked stores
    WoP = max(128, ((Wo + 127) // 128) * 128)
    itemsize = jnp.dtype(x.dtype).itemsize
    if tile_h is None:
        # conservative budget that fits v5e/v6e/v7x scoped VMEM comfortably
        tile_h = _pick_tile_h(Ho, WoP, Cin, Cout, itemsize, 20 * 1024 * 1024)
    TH = max(1, min(int(tile_h), Ho))
    nT = -(-Ho // TH)                          # number of output-row tiles
    Hph = nT * TH + 1                          # stride-2 phase rows needed (incl. halo)

    # ---- zero-padded input and the six (row-parity, kx) stride-2 column-sets ------
    pad_h = 2 * nT * TH + 2 - (H + 2)          # >= 0
    pad_w = max(0, 2 * WoP + 1 - (W + 2))
    xp = jnp.pad(x, ((0, 0), (0, 0), (1, 1 + pad_h), (1, 1 + pad_w)))
    combos = []
    for par in (0, 1):
        for kx in range(3):
            combos.append(xp[:, :, par:par + 2 * Hph:2, kx:kx + 2 * WoP:2])
    xc = jnp.stack(combos, axis=1)             # [N, 6, Cin, Hph, WoP]

    # unroll the row tiles (TH+1 rows each, the 1-row halo duplicated) and flatten the
    # spatial dims so every in-kernel tap is a contiguous, lane-aligned slice
    main = xc[:, :, :, :nT * TH, :].reshape(N, 6, Cin, nT, TH, WoP)
    halo = xc[:, :, :, TH:nT * TH + 1:TH, :].reshape(N, 6, Cin, nT, 1, WoP)
    xt = jnp.concatenate([main, halo], axis=4)                 # [N,6,Cin,nT,TH+1,WoP]
    xt = jnp.transpose(xt, (0, 3, 1, 2, 4, 5))                 # [N,nT,6,Cin,TH+1,WoP]
    xt = xt.reshape(N, nT, 6, Cin, (TH + 1) * WoP)

    # ---- fold inference-mode BN (+ conv bias) into weights / per-channel affine ---
    scale = gamma.astype(jnp.float32) / jnp.sqrt(var.astype(jnp.float32) + eps)
    shift = beta.astype(jnp.float32) - mean.astype(jnp.float32) * scale
    w9 = jnp.transpose(conv_w, (2, 3, 0, 1)).reshape(9, Cconv, Cin).astype(jnp.float32)
    wk = (w9 * scale[:Cconv][None, :, None]).astype(x.dtype)    # BN scale folded in
    bconv = (shift[:Cconv] + scale[:Cconv] * conv_b.astype(jnp.float32)).reshape(Cconv, 1)
    spool = scale[Cconv:].reshape(Cin, 1)
    bpool = shift[Cconv:].reshape(Cin, 1)

    kernel = functools.partial(_downsampler_kernel,
                               cin=Cin, cconv=Cconv, th=TH, wop=WoP)
    flat = pl.pallas_call(
        kernel,
        out_shape=jax.ShapeDtypeStruct((N, Cout, nT * TH * WoP), x.dtype),
        grid=(N, nT),
        in_specs=[
            pl.BlockSpec((1, 1, 6, Cin, (TH + 1) * WoP), lambda n, i: (n, i, 0, 0, 0)),
            pl.BlockSpec((9, Cconv, Cin), lambda n, i: (0, 0, 0)),   # resident weights
            pl.BlockSpec((Cconv, 1), lambda n, i: (0, 0)),
            pl.BlockSpec((Cin, 1), lambda n, i: (0, 0)),
            pl.BlockSpec((Cin, 1), lambda n, i: (0, 0)),
        ],
        out_specs=pl.BlockSpec((1, Cout, TH * WoP), lambda n, i: (n, 0, i)),
        compiler_params=pltpu.CompilerParams(
            dimension_semantics=("parallel", "parallel"),
            vmem_limit_bytes=48 * 1024 * 1024,
        ),
    )(xt, wk, bconv, spool, bpool)

    out = flat.reshape(N, Cout, nT * TH, WoP)[:, :, :Ho, :Wo]

    # Odd H/W: F.pad fills the pooled branch's bottom row / right column with zeros
    # *before* BN+ReLU, i.e. those outputs equal relu(BN(0)) = relu(shift_pool).
    if Ho > Hp or Wo > Wp:
        fill = jnp.maximum(bpool[:, 0], 0.0).astype(out.dtype)
        if Ho > Hp:
            out = out.at[:, Cconv:, Hp:, :].set(fill[None, :, None, None])
        if Wo > Wp:
            out = out.at[:, Cconv:, :, Wp:].set(fill[None, :, None, None])
    return out


def _reference_forward(x, w, b, gamma, beta, mean, var, eps=1e-3):
    """Pure-numpy reference with identical (inference-BN) semantics."""
    N, Cin, H, W = x.shape
    Cconv = w.shape[0]
    Ho = (H - 1) // 2 + 1
    Wo = (W - 1) // 2 + 1
    xp = np.pad(x, ((0, 0), (0, 0), (1, 1), (1, 1))).astype(np.float32)
    conv = np.zeros((N, Cconv, Ho, Wo), np.float32)
    for oh in range(Ho):
        for ow in range(Wo):
            patch = xp[:, :, 2 * oh:2 * oh + 3, 2 * ow:2 * ow + 3]
            conv[:, :, oh, ow] = np.einsum("ncij,ocij->no", patch, w) + b
    Hp, Wp = H // 2, W // 2
    pool = x[:, :, :2 * Hp, :2 * Wp].reshape(N, Cin, Hp, 2, Wp, 2).max(axis=(3, 5))
    pool_pad = np.zeros((N, Cin, Ho, Wo), np.float32)
    pool_pad[:, :, :Hp, :Wp] = pool
    feat = np.concatenate([conv, pool_pad], axis=1)
    scale = gamma / np.sqrt(var + eps)
    out = (feat - mean[None, :, None, None]) * scale[None, :, None, None] \
        + beta[None, :, None, None]
    return np.maximum(out, 0.0)


if __name__ == "__main__":
    def _run_case(key, N, Cin, Cout, H, W, tile_h):
        Cconv = Cout - Cin
        ks = jax.random.split(key, 7)
        x = jax.random.normal(ks[0], (N, Cin, H, W), dtype=jnp.float32)
        conv_w = jax.random.normal(ks[1], (Cconv, Cin, 3, 3), dtype=jnp.float32) * 0.2
        conv_b = jax.random.normal(ks[2], (Cconv,), dtype=jnp.float32) * 0.1
        gamma = jax.random.uniform(ks[3], (Cout,), minval=0.5, maxval=1.5)
        beta = jax.random.normal(ks[4], (Cout,)) * 0.1
        mean = jax.random.normal(ks[5], (Cout,)) * 0.1
        var = jax.random.uniform(ks[6], (Cout,), minval=0.5, maxval=1.5)

        out = downsampler_block_forward(x, conv_w, conv_b, gamma, beta, mean, var,
                                        eps=1e-3, tile_h=tile_h)
        out = jax.block_until_ready(out)

        ref = _reference_forward(*(np.asarray(a) for a in
                                   (x, conv_w, conv_b, gamma, beta, mean, var)),
                                 eps=1e-3)
        # default (non-HIGHEST) MXU precision -> bf16-pass rounding; loose tolerance
        np.testing.assert_allclose(np.asarray(out), ref, rtol=2e-2, atol=2e-2)
        assert out.shape == (N, Cout, (H + 1) // 2, (W + 1) // 2)

    key = jax.random.PRNGKey(0)
    k1, k2 = jax.random.split(key)
    # even spatial size, 2 row tiles per image (exercises the duplicated-halo path)
    _run_case(k1, N=2, Cin=4, Cout=8, H=16, W=16, tile_h=4)
    # odd spatial size, ragged last tile (exercises the pooled-branch F.pad fix)
    _run_case(k2, N=2, Cin=3, Cout=8, H=19, W=19, tile_h=4)
    print("KERNEL_OK")
</pallas_src>

<mosaic_0001>
module attributes {stable_mosaic.version = 11 : i64} {
  func.func @_downsampler_kernel(%arg0: i32, %arg1: i32, %arg2: memref<1x1x6x4x640xf32, #tpu.memory_space<vmem>>, %arg3: memref<9x4x4xf32, #tpu.memory_space<vmem>>, %arg4: memref<4x1xf32, #tpu.memory_space<vmem>>, %arg5: memref<4x1xf32, #tpu.memory_space<vmem>>, %arg6: memref<4x1xf32, #tpu.memory_space<vmem>>, %arg7: memref<1x8x512xf32, #tpu.memory_space<vmem>>) attributes {dimension_semantics = [#tpu.dimension_semantics<parallel>, #tpu.dimension_semantics<parallel>], iteration_bounds = array<i64: 2, 2>, scalar_prefetch = 0 : i64, scratch_operands = 0 : i64, tpu.core_type = #tpu.core_type<tc>, window_params = [{transform_indices = @transform_0, window_bounds = array<i64: 1, 1, 6, 4, 640>}, {pipeline_mode = #tpu.pipeline_mode<synchronous>, transform_indices = @transform_1, window_bounds = array<i64: 9, 4, 4>}, {pipeline_mode = #tpu.pipeline_mode<synchronous>, transform_indices = @transform_2, window_bounds = array<i64: 4, 1>}, {pipeline_mode = #tpu.pipeline_mode<synchronous>, transform_indices = @transform_3, window_bounds = array<i64: 4, 1>}, {pipeline_mode = #tpu.pipeline_mode<synchronous>, transform_indices = @transform_4, window_bounds = array<i64: 4, 1>}, {transform_indices = @transform_5, window_bounds = array<i64: 1, 8, 512>}]} {
    %c0 = arith.constant 0 : index
    %c0_0 = arith.constant 0 : index
    %c0_1 = arith.constant 0 : index
    %c0_2 = arith.constant 0 : index
    %c0_3 = arith.constant 0 : index
    %0 = vector.load %arg2[%c0, %c0_0, %c0_1, %c0_2, %c0_3] : memref<1x1x6x4x640xf32, #tpu.memory_space<vmem>>, vector<1x1x1x4x512xf32>
    %1 = vector.shape_cast %0 : vector<1x1x1x4x512xf32> to vector<4x512xf32>
    %c0_4 = arith.constant 0 : index
    %c0_5 = arith.constant 0 : index
    %c0_6 = arith.constant 0 : index
    %2 = vector.load %arg3[%c0_4, %c0_5, %c0_6] : memref<9x4x4xf32, #tpu.memory_space<vmem>>, vector<1x4x4xf32>
    %3 = vector.shape_cast %2 : vector<1x4x4xf32> to vector<4x4xf32>
    %cst = arith.constant dense<0.000000e+00> : vector<4x512xf32>
    %4 = tpu.matmul %3, %1, %cst {dimension_numbers = #tpu.dot_dimension_numbers<[1], [0], [0], [1], [0, 0, 1, 1], [], []>} : vector<4x4xf32>, vector<4x512xf32>, vector<4x512xf32> -> vector<4x512xf32>
    %c0_7 = arith.constant 0 : index
    %c0_8 = arith.constant 0 : index
    %c1 = arith.constant 1 : index
    %c0_9 = arith.constant 0 : index
    %c0_10 = arith.constant 0 : index
    %5 = vector.load %arg2[%c0_7, %c0_8, %c1, %c0_9, %c0_10] : memref<1x1x6x4x640xf32, #tpu.memory_space<vmem>>, vector<1x1x1x4x512xf32>
    %6 = vector.shape_cast %5 : vector<1x1x1x4x512xf32> to vector<4x512xf32>
    %c1_11 = arith.constant 1 : index
    %c0_12 = arith.constant 0 : index
    %c0_13 = arith.constant 0 : index
    %7 = vector.load %arg3[%c1_11, %c0_12, %c0_13] : memref<9x4x4xf32, #tpu.memory_space<vmem>>, vector<1x4x4xf32>
    %8 = vector.shape_cast %7 : vector<1x4x4xf32> to vector<4x4xf32>
    %cst_14 = arith.constant dense<0.000000e+00> : vector<4x512xf32>
    %9 = tpu.matmul %8, %6, %cst_14 {dimension_numbers = #tpu.dot_dimension_numbers<[1], [0], [0], [1], [0, 0, 1, 1], [], []>} : vector<4x4xf32>, vector<4x512xf32>, vector<4x512xf32> -> vector<4x512xf32>
    %10 = arith.addf %4, %9 : vector<4x512xf32>
    %c0_15 = arith.constant 0 : index
    %c0_16 = arith.constant 0 : index
    %c2 = arith.constant 2 : index
    %c0_17 = arith.constant 0 : index
    %c0_18 = arith.constant 0 : index
    %11 = vector.load %arg2[%c0_15, %c0_16, %c2, %c0_17, %c0_18] : memref<1x1x6x4x640xf32, #tpu.memory_space<vmem>>, vector<1x1x1x4x512xf32>
    %12 = vector.shape_cast %11 : vector<1x1x1x4x512xf32> to vector<4x512xf32>
    %c2_19 = arith.constant 2 : index
    %c0_20 = arith.constant 0 : index
    %c0_21 = arith.constant 0 : index
    %13 = vector.load %arg3[%c2_19, %c0_20, %c0_21] : memref<9x4x4xf32, #tpu.memory_space<vmem>>, vector<1x4x4xf32>
    %14 = vector.shape_cast %13 : vector<1x4x4xf32> to vector<4x4xf32>
    %cst_22 = arith.constant dense<0.000000e+00> : vector<4x512xf32>
    %15 = tpu.matmul %14, %12, %cst_22 {dimension_numbers = #tpu.dot_dimension_numbers<[1], [0], [0], [1], [0, 0, 1, 1], [], []>} : vector<4x4xf32>, vector<4x512xf32>, vector<4x512xf32> -> vector<4x512xf32>
    %16 = arith.addf %10, %15 : vector<4x512xf32>
    %c0_23 = arith.constant 0 : index
    %c0_24 = arith.constant 0 : index
    %c3 = arith.constant 3 : index
    %c0_25 = arith.constant 0 : index
    %c0_26 = arith.constant 0 : index
    %17 = vector.load %arg2[%c0_23, %c0_24, %c3, %c0_25, %c0_26] : memref<1x1x6x4x640xf32, #tpu.memory_space<vmem>>, vector<1x1x1x4x512xf32>
    %18 = vector.shape_cast %17 : vector<1x1x1x4x512xf32> to vector<4x512xf32>
    %c3_27 = arith.constant 3 : index
    %c0_28 = arith.constant 0 : index
    %c0_29 = arith.constant 0 : index
    %19 = vector.load %arg3[%c3_27, %c0_28, %c0_29] : memref<9x4x4xf32, #tpu.memory_space<vmem>>, vector<1x4x4xf32>
    %20 = vector.shape_cast %19 : vector<1x4x4xf32> to vector<4x4xf32>
    %cst_30 = arith.constant dense<0.000000e+00> : vector<4x512xf32>
    %21 = tpu.matmul %20, %18, %cst_30 {dimension_numbers = #tpu.dot_dimension_numbers<[1], [0], [0], [1], [0, 0, 1, 1], [], []>} : vector<4x4xf32>, vector<4x512xf32>, vector<4x512xf32> -> vector<4x512xf32>
    %22 = arith.addf %16, %21 : vector<4x512xf32>
    %c0_31 = arith.constant 0 : index
    %c0_32 = arith.constant 0 : index
    %c4 = arith.constant 4 : index
    %c0_33 = arith.constant 0 : index
    %c0_34 = arith.constant 0 : index
    %23 = vector.load %arg2[%c0_31, %c0_32, %c4, %c0_33, %c0_34] : memref<1x1x6x4x640xf32, #tpu.memory_space<vmem>>, vector<1x1x1x4x512xf32>
    %24 = vector.shape_cast %23 : vector<1x1x1x4x512xf32> to vector<4x512xf32>
    %c4_35 = arith.constant 4 : index
    %c0_36 = arith.constant 0 : index
    %c0_37 = arith.constant 0 : index
    %25 = vector.load %arg3[%c4_35, %c0_36, %c0_37] : memref<9x4x4xf32, #tpu.memory_space<vmem>>, vector<1x4x4xf32>
    %26 = vector.shape_cast %25 : vector<1x4x4xf32> to vector<4x4xf32>
    %cst_38 = arith.constant dense<0.000000e+00> : vector<4x512xf32>
    %27 = tpu.matmul %26, %24, %cst_38 {dimension_numbers = #tpu.dot_dimension_numbers<[1], [0], [0], [1], [0, 0, 1, 1], [], []>} : vector<4x4xf32>, vector<4x512xf32>, vector<4x512xf32> -> vector<4x512xf32>
    %28 = arith.addf %22, %27 : vector<4x512xf32>
    %c0_39 = arith.constant 0 : index
    %c0_40 = arith.constant 0 : index
    %c5 = arith.constant 5 : index
    %c0_41 = arith.constant 0 : index
    %c0_42 = arith.constant 0 : index
    %29 = vector.load %arg2[%c0_39, %c0_40, %c5, %c0_41, %c0_42] : memref<1x1x6x4x640xf32, #tpu.memory_space<vmem>>, vector<1x1x1x4x512xf32>
    %30 = vector.shape_cast %29 : vector<1x1x1x4x512xf32> to vector<4x512xf32>
    %c5_43 = arith.constant 5 : index
    %c0_44 = arith.constant 0 : index
    %c0_45 = arith.constant 0 : index
    %31 = vector.load %arg3[%c5_43, %c0_44, %c0_45] : memref<9x4x4xf32, #tpu.memory_space<vmem>>, vector<1x4x4xf32>
    %32 = vector.shape_cast %31 : vector<1x4x4xf32> to vector<4x4xf32>
    %cst_46 = arith.constant dense<0.000000e+00> : vector<4x512xf32>
    %33 = tpu.matmul %32, %30, %cst_46 {dimension_numbers = #tpu.dot_dimension_numbers<[1], [0], [0], [1], [0, 0, 1, 1], [], []>} : vector<4x4xf32>, vector<4x512xf32>, vector<4x512xf32> -> vector<4x512xf32>
    %34 = arith.addf %28, %33 : vector<4x512xf32>
    %35 = arith.maximumf %24, %30 : vector<4x512xf32>
    %c0_47 = arith.constant 0 : index
    %c0_48 = arith.constant 0 : index
    %c0_49 = arith.constant 0 : index
    %c0_50 = arith.constant 0 : index
    %c128 = arith.constant 128 : index
    %36 = vector.load %arg2[%c0_47, %c0_48, %c0_49, %c0_50, %c128] : memref<1x1x6x4x640xf32, #tpu.memory_space<vmem>>, vector<1x1x1x4x512xf32>
    %37 = vector.shape_cast %36 : vector<1x1x1x4x512xf32> to vector<4x512xf32>
    %c6 = arith.constant 6 : index
    %c0_51 = arith.constant 0 : index
    %c0_52 = arith.constant 0 : index
    %38 = vector.load %arg3[%c6, %c0_51, %c0_52] : memref<9x4x4xf32, #tpu.memory_space<vmem>>, vector<1x4x4xf32>
    %39 = vector.shape_cast %38 : vector<1x4x4xf32> to vector<4x4xf32>
    %cst_53 = arith.constant dense<0.000000e+00> : vector<4x512xf32>
    %40 = tpu.matmul %39, %37, %cst_53 {dimension_numbers = #tpu.dot_dimension_numbers<[1], [0], [0], [1], [0, 0, 1, 1], [], []>} : vector<4x4xf32>, vector<4x512xf32>, vector<4x512xf32> -> vector<4x512xf32>
    %41 = arith.addf %34, %40 : vector<4x512xf32>
    %c0_54 = arith.constant 0 : index
    %c0_55 = arith.constant 0 : index
    %c1_56 = arith.constant 1 : index
    %c0_57 = arith.constant 0 : index
    %c128_58 = arith.constant 128 : index
    %42 = vector.load %arg2[%c0_54, %c0_55, %c1_56, %c0_57, %c128_58] : memref<1x1x6x4x640xf32, #tpu.memory_space<vmem>>, vector<1x1x1x4x512xf32>
    %43 = vector.shape_cast %42 : vector<1x1x1x4x512xf32> to vector<4x512xf32>
    %c7 = arith.constant 7 : index
    %c0_59 = arith.constant 0 : index
    %c0_60 = arith.constant 0 : index
    %44 = vector.load %arg3[%c7, %c0_59, %c0_60] : memref<9x4x4xf32, #tpu.memory_space<vmem>>, vector<1x4x4xf32>
    %45 = vector.shape_cast %44 : vector<1x4x4xf32> to vector<4x4xf32>
    %cst_61 = arith.constant dense<0.000000e+00> : vector<4x512xf32>
    %46 = tpu.matmul %45, %43, %cst_61 {dimension_numbers = #tpu.dot_dimension_numbers<[1], [0], [0], [1], [0, 0, 1, 1], [], []>} : vector<4x4xf32>, vector<4x512xf32>, vector<4x512xf32> -> vector<4x512xf32>
    %47 = arith.addf %41, %46 : vector<4x512xf32>
    %48 = arith.maximumf %35, %43 : vector<4x512xf32>
    %c0_62 = arith.constant 0 : index
    %c0_63 = arith.constant 0 : index
    %c2_64 = arith.constant 2 : index
    %c0_65 = arith.constant 0 : index
    %c128_66 = arith.constant 128 : index
    %49 = vector.load %arg2[%c0_62, %c0_63, %c2_64, %c0_65, %c128_66] : memref<1x1x6x4x640xf32, #tpu.memory_space<vmem>>, vector<1x1x1x4x512xf32>
    %50 = vector.shape_cast %49 : vector<1x1x1x4x512xf32> to vector<4x512xf32>
    %c8 = arith.constant 8 : index
    %c0_67 = arith.constant 0 : index
    %c0_68 = arith.constant 0 : index
    %51 = vector.load %arg3[%c8, %c0_67, %c0_68] : memref<9x4x4xf32, #tpu.memory_space<vmem>>, vector<1x4x4xf32>
    %52 = vector.shape_cast %51 : vector<1x4x4xf32> to vector<4x4xf32>
    %cst_69 = arith.constant dense<0.000000e+00> : vector<4x512xf32>
    %53 = tpu.matmul %52, %50, %cst_69 {dimension_numbers = #tpu.dot_dimension_numbers<[1], [0], [0], [1], [0, 0, 1, 1], [], []>} : vector<4x4xf32>, vector<4x512xf32>, vector<4x512xf32> -> vector<4x512xf32>
    %54 = arith.addf %47, %53 : vector<4x512xf32>
    %55 = arith.maximumf %48, %50 : vector<4x512xf32>
    %c0_70 = arith.constant 0 : index
    %c0_71 = arith.constant 0 : index
    %56 = vector.load %arg4[%c0_70, %c0_71] : memref<4x1xf32, #tpu.memory_space<vmem>>, vector<4x1xf32>
    %57 = vector.broadcast %56 : vector<4x1xf32> to vector<4x512xf32>
    %58 = arith.addf %54, %57 : vector<4x512xf32>
    %cst_72 = arith.constant 0.000000e+00 : f32
    %59 = vector.broadcast %cst_72 : f32 to vector<4x512xf32>
    %60 = arith.maximumf %58, %59 : vector<4x512xf32>
    %c0_73 = arith.constant 0 : index
    %c0_74 = arith.constant 0 : index
    %61 = vector.load %arg5[%c0_73, %c0_74] : memref<4x1xf32, #tpu.memory_space<vmem>>, vector<4x1xf32>
    %62 = vector.broadcast %61 : vector<4x1xf32> to vector<4x512xf32>
    %63 = arith.mulf %55, %62 : vector<4x512xf32>
    %c0_75 = arith.constant 0 : index
    %c0_76 = arith.constant 0 : index
    %64 = vector.load %arg6[%c0_75, %c0_76] : memref<4x1xf32, #tpu.memory_space<vmem>>, vector<4x1xf32>
    %65 = vector.broadcast %64 : vector<4x1xf32> to vector<4x512xf32>
    %66 = arith.addf %63, %65 : vector<4x512xf32>
    %cst_77 = arith.constant 0.000000e+00 : f32
    %67 = vector.broadcast %cst_77 : f32 to vector<4x512xf32>
    %68 = arith.maximumf %66, %67 : vector<4x512xf32>
    %c0_78 = arith.constant 0 : index
    %c0_79 = arith.constant 0 : index
    %c0_80 = arith.constant 0 : index
    %69 = vector.load %arg7[%c0_78, %c0_79, %c0_80] : memref<1x8x512xf32, #tpu.memory_space<vmem>>, vector<1x4x512xf32>
    %70 = vector.shape_cast %69 : vector<1x4x512xf32> to vector<4x512xf32>
    %71 = vector.shape_cast %60 : vector<4x512xf32> to vector<1x4x512xf32>
    tpu.vector_store %arg7[%c0_78, %c0_79, %c0_80], %71 {strides = array<i32>} : memref<1x8x512xf32, #tpu.memory_space<vmem>>, vector<1x4x512xf32>,
    %c0_81 = arith.constant 0 : index
    %c4_82 = arith.constant 4 : index
    %c0_83 = arith.constant 0 : index
    %72 = vector.load %arg7[%c0_81, %c4_82, %c0_83] : memref<1x8x512xf32, #tpu.memory_space<vmem>>, vector<1x4x512xf32>
    %73 = vector.shape_cast %72 : vector<1x4x512xf32> to vector<4x512xf32>
    %74 = vector.shape_cast %68 : vector<4x512xf32> to vector<1x4x512xf32>
    tpu.vector_store %arg7[%c0_81, %c4_82, %c0_83], %74 {strides = array<i32>} : memref<1x8x512xf32, #tpu.memory_space<vmem>>, vector<1x4x512xf32>,
    return
  }
  func.func @transform_0(%arg0: i32, %arg1: i32) -> (i32, i32, i32, i32, i32) {
    %c0_i32 = arith.constant 0 : i32
    %c0_i32_0 = arith.constant 0 : i32
    %c0_i32_1 = arith.constant 0 : i32
    %c0_i32_2 = arith.constant 0 : i32
    return %arg0, %arg1, %c0_i32, %c0_i32_0, %c0_i32_1 : i32, i32, i32, i32, i32
  }
  func.func @transform_1(%arg0: i32, %arg1: i32) -> (i32, i32, i32) {
    %c0_i32 = arith.constant 0 : i32
    %c0_i32_0 = arith.constant 0 : i32
    %c0_i32_1 = arith.constant 0 : i32
    %c0_i32_2 = arith.constant 0 : i32
    return %c0_i32, %c0_i32_0, %c0_i32_1 : i32, i32, i32
  }
  func.func @transform_2(%arg0: i32, %arg1: i32) -> (i32, i32) {
    %c0_i32 = arith.constant 0 : i32
    %c0_i32_0 = arith.constant 0 : i32
    %c0_i32_1 = arith.constant 0 : i32
    return %c0_i32, %c0_i32_0 : i32, i32
  }
  func.func @transform_3(%arg0: i32, %arg1: i32) -> (i32, i32) {
    %c0_i32 = arith.constant 0 : i32
    %c0_i32_0 = arith.constant 0 : i32
    %c0_i32_1 = arith.constant 0 : i32
    return %c0_i32, %c0_i32_0 : i32, i32
  }
  func.func @transform_4(%arg0: i32, %arg1: i32) -> (i32, i32) {
    %c0_i32 = arith.constant 0 : i32
    %c0_i32_0 = arith.constant 0 : i32
    %c0_i32_1 = arith.constant 0 : i32
    return %c0_i32, %c0_i32_0 : i32, i32
  }
  func.func @transform_5(%arg0: i32, %arg1: i32) -> (i32, i32, i32) {
    %c0_i32 = arith.constant 0 : i32
    %c0_i32_0 = arith.constant 0 : i32
    return %arg0, %c0_i32, %arg1 : i32, i32, i32
  }
}

</mosaic_0001>

<llo_original>
// kernel: downsampler_block_forward.1
$region0: #{downsampler_block_forward.1}
  #allocation0 [shape = 'u32[]', space=smem, size = 0x4, offset = 0x4, fixed_abs, tag = 'smem constant byte address 0x4 - core index']
  #allocation1 [shape = 'u32[72,128]{1,0:T(1,128)}', space=vmem, size = 0x9000, scoped, tag = 'internal scratch']
  %s0 = inlined_call_operand.vmem [shape: f32[2,2,6,4,640], index: 0, kind: input, shape index: {}]
  %s1 = inlined_call_operand.vmem [shape: f32[9,4,4], index: 1, kind: input, shape index: {}]
  %s2 = inlined_call_operand.vmem [shape: f32[4,1], index: 2, kind: input, shape index: {}]
  %s3 = inlined_call_operand.vmem [shape: f32[4,1], index: 3, kind: input, shape index: {}]
  %s4 = inlined_call_operand.vmem [shape: f32[4,1], index: 4, kind: input, shape index: {}]
  %s5 = inlined_call_operand.vmem [shape: f32[2,8,1024], index: 5, kind: output, shape index: {}]
  %s6 = sld [smem:[#allocation0]]
  $region53: #{downsampler_block_forward.1} parent=0
    _
  %s8 = ssub.s32 1, %s6
  %s9 = scalar_select 0, %s8, %s6
  loop: start=0, step=1, limit=6
  $region2: #{downsampler_block_forward.1} parent=0 // loop_pre_header
    _
  $region3: #{downsampler_block_forward.1} parent=0 // loop_header
    %s11 = sphi 0, %s15
    %p12 = scmp.ge.s32.totalorder %s11, 6
    %s18 = sphi 0, %s30
    %s19 = sphi 0, %s26
    %s20 = sphi 0, %s18
    %s21 = sphi 0, %s19
    %s22 = sphi 0, %s20
    %s23 = sphi 0, %s21
    %s35 = sphi 0, %s37
    %s38 = sphi 0, %s35
    %s39 = sphi 0, %s38
    %s55 = sphi 0, %s39
    %s59 = sphi 0, %s59
    %s61 = sphi 0, %s59
    %s62 = sphi 0, %s61
    %s76 = sphi 0, %s62
    %s80 = sphi 0, %s80
    %s82 = sphi 0, %s80
    %s83 = sphi 0, %s82
    %s97 = sphi 0, %s83
    %s101 = sphi 0, %s101
    %s103 = sphi 0, %s101
    %s104 = sphi 0, %s103
    %s118 = sphi 0, %s104
    %s122 = sphi 0, %s122
    %s124 = sphi 0, %s122
    %s125 = sphi 0, %s124
    %s139 = sphi 0, %s125
    %s147 = sphi 0, %s149
    %s150 = sphi 0, %s147
    %s151 = sphi 0, %s150
    %s167 = sphi 0, %s151
  $region4: #{downsampler_block_forward.1} parent=0 // loop_header_branch
    %14 = sbr.rel (%p12) target = $region8
  $region5: #{downsampler_block_forward.1} parent=0 // loop_body
    %s16 = ssub.s32 %s11, 1
    %s17 = ssub.s32 %s11, 2
    %s24 = sadd.s32 1, %s19
    %p25 = scmp.ge.s32.totalorder %s24, 2
    %s26 = scalar_select %p25, 0, %s24
    %s27 = sadd.s32 1, %s18
    %s28 = scalar_select %p25, %s27, %s18
    %p29 = scmp.ge.s32.totalorder %s28, 2
    %s30 = scalar_select %p29, 0, %s28
    %s31 = ssub.s32 %s18, %s30
    %s32 = ssub.s32 %s19, %s26
    %s33 = sor.u32 %s31, %s32
    %p34 = scmp.eq.s32.totalorder %s33, 0
    %s36 = sadd.s32 %s35, 1
    %s37 = scalar_select %p34, %s35, %s36
    %p40 = pneg %p34
    %p41 = scmp.eq.s32.totalorder %s11, 3
    %p42 = por %p40, %p41
    %p43 = scmp.ne.s32.totalorder %s35, %s38
    %p44 = scmp.eq.s32.totalorder %s11, 0
    %p45 = por %p43, %p44
    %p46 = scmp.ne.s32.totalorder %s35, %s38
    %p47 = scmp.eq.s32.totalorder %s16, 3
    %p48 = por %p46, %p47
    %p49 = scmp.ne.s32.totalorder %s38, %s39
    %p50 = scmp.eq.s32.totalorder %s16, 0
    %p51 = por %p49, %p50
    %p52 = scmp.ne.s32.totalorder %s38, %s39
    %p53 = scmp.eq.s32.totalorder %s17, 3
    %p54 = por %p52, %p53
    %p56 = scmp.ne.s32.totalorder %s39, %s55
    %p57 = scmp.eq.s32.totalorder %s17, 0
    %p58 = por %p56, %p57
    %s60 = sadd.s32 %s59, 1
    %p63 = scmp.eq.s32.totalorder %s11, 3
    %p64 = scmp.ne.s32.totalorder %s59, %s61
    %p65 = scmp.eq.s32.totalorder %s11, 0
    %p66 = por %p64, %p65
    %p67 = scmp.ne.s32.totalorder %s59, %s61
    %p68 = scmp.eq.s32.totalorder %s16, 3
    %p69 = por %p67, %p68
    %p70 = scmp.ne.s32.totalorder %s61, %s62
    %p71 = scmp.eq.s32.totalorder %s16, 0
    %p72 = por %p70, %p71
    %p73 = scmp.ne.s32.totalorder %s61, %s62
    %p74 = scmp.eq.s32.totalorder %s17, 3
    %p75 = por %p73, %p74
    %p77 = scmp.ne.s32.totalorder %s62, %s76
    %p78 = scmp.eq.s32.totalorder %s17, 0
    %p79 = por %p77, %p78
    %s81 = sadd.s32 %s80, 1
    %p84 = scmp.eq.s32.totalorder %s11, 3
    %p85 = scmp.ne.s32.totalorder %s80, %s82
    %p86 = scmp.eq.s32.totalorder %s11, 0
    %p87 = por %p85, %p86
    %p88 = scmp.ne.s32.totalorder %s80, %s82
    %p89 = scmp.eq.s32.totalorder %s16, 3
    %p90 = por %p88, %p89
    %p91 = scmp.ne.s32.totalorder %s82, %s83
    %p92 = scmp.eq.s32.totalorder %s16, 0
    %p93 = por %p91, %p92
    %p94 = scmp.ne.s32.totalorder %s82, %s83
    %p95 = scmp.eq.s32.totalorder %s17, 3
    %p96 = por %p94, %p95
    %p98 = scmp.ne.s32.totalorder %s83, %s97
    %p99 = scmp.eq.s32.totalorder %s17, 0
    %p100 = por %p98, %p99
    %s102 = sadd.s32 %s101, 1
    %p105 = scmp.eq.s32.totalorder %s11, 3
    %p106 = scmp.ne.s32.totalorder %s101, %s103
    %p107 = scmp.eq.s32.totalorder %s11, 0
    %p108 = por %p106, %p107
    %p109 = scmp.ne.s32.totalorder %s101, %s103
    %p110 = scmp.eq.s32.totalorder %s16, 3
    %p111 = por %p109, %p110
    %p112 = scmp.ne.s32.totalorder %s103, %s104
    %p113 = scmp.eq.s32.totalorder %s16, 0
    %p114 = por %p112, %p113
    %p115 = scmp.ne.s32.totalorder %s103, %s104
    %p116 = scmp.eq.s32.totalorder %s17, 3
    %p117 = por %p115, %p116
    %p119 = scmp.ne.s32.totalorder %s104, %s118
    %p120 = scmp.eq.s32.totalorder %s17, 0
    %p121 = por %p119, %p120
    %s123 = sadd.s32 %s122, 1
    %p126 = scmp.eq.s32.totalorder %s11, 3
    %p127 = scmp.ne.s32.totalorder %s122, %s124
    %p128 = scmp.eq.s32.totalorder %s11, 0
    %p129 = por %p127, %p128
    %p130 = scmp.ne.s32.totalorder %s122, %s124
    %p131 = scmp.eq.s32.totalorder %s16, 3
    %p132 = por %p130, %p131
    %p133 = scmp.ne.s32.totalorder %s124, %s125
    %p134 = scmp.eq.s32.totalorder %s16, 0
    %p135 = por %p133, %p134
    %p136 = scmp.ne.s32.totalorder %s124, %s125
    %p137 = scmp.eq.s32.totalorder %s17, 3
    %p138 = por %p136, %p137
    %p140 = scmp.ne.s32.totalorder %s125, %s139
    %p141 = scmp.eq.s32.totalorder %s17, 0
    %p142 = por %p140, %p141
    %s143 = ssub.s32 %s18, %s30
    %s144 = ssub.s32 %s19, %s26
    %s145 = sor.u32 %s143, %s144
    %p146 = scmp.eq.s32.totalorder %s145, 0
    %s148 = sadd.s32 %s147, 1
    %s149 = scalar_select %p146, %s147, %s148
    %p152 = pneg %p146
    %p153 = scmp.eq.s32.totalorder %s11, 3
    %p154 = por %p152, %p153
    %p155 = scmp.ne.s32.totalorder %s147, %s150
    %p156 = scmp.eq.s32.totalorder %s11, 0
    %p157 = por %p155, %p156
    %p158 = scmp.ne.s32.totalorder %s147, %s150
    %p159 = scmp.eq.s32.totalorder %s16, 3
    %p160 = por %p158, %p159
    %p161 = scmp.ne.s32.totalorder %s150, %s151
    %p162 = scmp.eq.s32.totalorder %s16, 0
    %p163 = por %p161, %p162
    %p164 = scmp.ne.s32.totalorder %s150, %s151
    %p165 = scmp.eq.s32.totalorder %s17, 3
    %p166 = por %p164, %p165
    %p168 = scmp.ne.s32.totalorder %s151, %s167
    %p169 = scmp.eq.s32.totalorder %s17, 0
    %p170 = por %p168, %p169
    %p171 = scmp.le.s32.totalorder 1, %s11
    %p172 = scmp.lt.s32.totalorder %s11, 5
    %p173 = pnand %p171, %p172
    %p174 = pneg %p173
    // Predicated region
    $region9: #{downsampler_block_forward.1} parent=5 // pred_check
      _
    $region10: #{downsampler_block_forward.1} parent=5 // pred_check_branch
      %176 = sbr.rel (%p173) target = $region12
    $region11: #{downsampler_block_forward.1} parent=5 // pred_region
      %s177 = ssub.s32 %s11, 1
      // Predicated region
      $region13: #{downsampler_block_forward.1} parent=11 // pred_check
        %p178 = pneg %p72
      $region14: #{downsampler_block_forward.1} parent=11 // pred_check_branch
        %180 = sbr.rel (%p178) target = $region16
      $region15: #{downsampler_block_forward.1} parent=11 // pred_region
        _
      $region16: #{downsampler_block_forward.1} parent=11 // pred_fallthru
        _
      // Predicated region
      $region17: #{downsampler_block_forward.1} parent=11 // pred_check
        %p181 = pneg %p93
      $region18: #{downsampler_block_forward.1} parent=11 // pred_check_branch
        %183 = sbr.rel (%p181) target = $region20
      $region19: #{downsampler_block_forward.1} parent=11 // pred_region
        _
      $region20: #{downsampler_block_forward.1} parent=11 // pred_fallthru
        _
      // Predicated region
      $region21: #{downsampler_block_forward.1} parent=11 // pred_check
        %p184 = pneg %p114
      $region22: #{downsampler_block_forward.1} parent=11 // pred_check_branch
        %186 = sbr.rel (%p184) target = $region24
      $region23: #{downsampler_block_forward.1} parent=11 // pred_region
        _
      $region24: #{downsampler_block_forward.1} parent=11 // pred_fallthru
        _
      // Predicated region
      $region25: #{downsampler_block_forward.1} parent=11 // pred_check
        %p187 = pneg %p135
      $region26: #{downsampler_block_forward.1} parent=11 // pred_check_branch
        %189 = sbr.rel (%p187) target = $region28
      $region27: #{downsampler_block_forward.1} parent=11 // pred_region
        _
      $region28: #{downsampler_block_forward.1} parent=11 // pred_fallthru
        _
    $region12: #{downsampler_block_forward.1} parent=5 // pred_fallthru
      _
    %p190 = scmp.lt.s32.totalorder %s11, 4
    // Predicated region
    $region29: #{downsampler_block_forward.1} parent=5 // pred_check
      %p191 = pneg %p190
    $region30: #{downsampler_block_forward.1} parent=5 // pred_check_branch
      %193 = sbr.rel (%p191) target = $region32
    $region31: #{downsampler_block_forward.1} parent=5 // pred_region
      // Predicated region
      $region33: #{downsampler_block_forward.1} parent=31 // pred_check
        %p194 = pneg %p45
      $region34: #{downsampler_block_forward.1} parent=31 // pred_check_branch
        %196 = sbr.rel (%p194) target = $region36
      $region35: #{downsampler_block_forward.1} parent=31 // pred_region
        %p197 = scmp.lt.s32.totalorder %s18, 1
        %s198 = scalar_select %p197, %s18, 1
        %p199 = scmp.lt.s32.totalorder %s19, 1
        %s200 = scalar_select %p199, %s19, 1
        %s201 = smul.addr %s200, 30
        %s202 = smul.addr %s198, 60
        %s203 = sadd.s32 %s201, %s202
        %s204 = smul.addr %s203, 4
        %s205 = scalar_lea.vmem %s0, %s204
      $region36: #{downsampler_block_forward.1} parent=31 // pred_fallthru
        _
    $region32: #{downsampler_block_forward.1} parent=5 // pred_fallthru
      _
    %p206 = scmp.le.s32.totalorder 1, %s11
    %p207 = scmp.lt.s32.totalorder %s11, 5
    %p208 = pnand %p206, %p207
    %p209 = pneg %p208
    // Predicated region
    $region37: #{downsampler_block_forward.1} parent=5 // pred_check
      _
    $region38: #{downsampler_block_forward.1} parent=5 // pred_check_branch
      %211 = sbr.rel (%p208) target = $region40
    $region39: #{downsampler_block_forward.1} parent=5 // pred_region
      %s212 = ssub.s32 %s11, 1
      %p213 = scmp.lt.s32.totalorder %s20, 1
      %s214 = scalar_select %p213, %s20, 1
      %p215 = scmp.lt.s32.totalorder %s21, 1
      %s216 = scalar_select %p215, %s21, 1
      %s217 = smul.addr %s216, 30
      %s218 = smul.addr %s214, 60
      %s219 = sadd.s32 %s217, %s218
      %s220 = smul.addr %s219, 4
      %s221 = scalar_lea.vmem %s0, %s220
      %p222 = pneg %p51
      %p223 = pneg %p48
      %p224 = pneg %p72
      %p225 = pneg %p69
      %p226 = pneg %p93
      %p227 = pneg %p90
      %p228 = pneg %p114
      %p229 = pneg %p111
      %p230 = pneg %p135
      %p231 = pneg %p132
      %p232 = pneg %p163
      %p233 = pneg %p160
      %s234 = smul.u32 4, %s21
      %p235 = scmp.lt.s32.totalorder %s20, 1
      %s236 = scalar_select %p235, %s20, 1
      %p237 = scmp.lt.s32.totalorder %s234, 7
      %s238 = scalar_select %p237, %s234, 7
      %s239 = smul.addr %s236, 8
      %s240 = sadd.s32 %s238, %s239
      %s241 = smul.addr %s240, 8
      %s242 = scalar_lea.vmem %s5, %s241
      %p243 = scmp.lt.s32.totalorder %s20, 1
      %s244 = scalar_select %p243, %s20, 1
      %p245 = scmp.lt.s32.totalorder %s21, 1
      %s246 = scalar_select %p245, %s21, 1
      %s247 = smul.addr %s246, 30
      %s248 = smul.addr %s244, 60
      %s249 = sadd.s32 %s247, %s248
      %s250 = smul.addr %s249, 4
      %s251 = scalar_lea.vmem %s0, %s250
      %s252 = smul.u32 4, %s21
      %p253 = scmp.lt.s32.totalorder %s20, 1
      %s254 = scalar_select %p253, %s20, 1
      %p255 = scmp.lt.s32.totalorder %s252, 7
      %s256 = scalar_select %p255, %s252, 7
      %s257 = smul.addr %s254, 8
      %s258 = sadd.s32 %s256, %s257
      %s259 = smul.addr %s258, 8
      %s260 = scalar_lea.vmem %s5, %s259
      %s261 = smul.u32 4, %s21
      %v262 = vld [vmem:[%s251] sm:$0xff]
      %v263 = vld [vmem:[%s251 + $0x8] sm:$0xff]
      %v264 = vld [vmem:[%s1] sm:$0xf]
      %s265 = scalar_lea.vmem %s251, 20
      %v266 = vld [vmem:[%s265] sm:$0xff]
      %v267 = vld [vmem:[%s265 + $0x8] sm:$0xff]
      %s268 = scalar_lea.vmem %s1, 4
      %v269 = vld [vmem:[%s268] sm:$0xf]
      %272 = vst [vmem:[#allocation1] ss:$2 sm:$0xff] %v266
      %s273 = scalar_lea.vmem [#allocation1], 16
      %274 = vst [vmem:[%s273] ss:$2 sm:$0xff] %v267
      %v275 = vld.sshfl [vmem:[#allocation1] sm:$0xff pattern:$0x75316420]
      %v276 = vld.sshfl [vmem:[#allocation1 + $0x8] sm:$0xff pattern:$0x75316420]
      %v277 = vld.sshfl [vmem:[#allocation1 + $0x10] sm:$0xff pattern:$0x75316420]
      %v278 = vld.sshfl [vmem:[#allocation1 + $0x18] sm:$0xff pattern:$0x75316420]
      %vm279 = vcmask 31744
      %v281 = vsel %vm279, %v269, 0
      %vm283 = vcmask 1043456
      %v284 = vsel %vm283, %v275, 0
      %v286 = vsel %vm283, %v276, 0
      %v288 = vsel %vm283, %v277, 0
      %v290 = vsel %vm283, %v278, 0
      %292 = vmatpush.msra.mxu0 0.0
      %293 = vmatpush.msra.mxu0 0.0
      %294 = vmatpush.msra.mxu0 0.0
      %295 = vmatpush.msra.mxu0 0.0
      %296 = vmatpush.msra.mxu0 0.0
      %297 = vmatpush.msra.mxu0 0.0
      %298 = vmatpush.msra.mxu0 0.0
      %299 = vmatpush.msra.mxu0 0.0
      %300 = vmatpush.msra.mxu0 0.0
      %301 = vmatpush.msra.mxu0 0.0
      %302 = vmatpush.msra.mxu0 0.0
      %303 = vmatpush.msra.mxu0 0.0
      %304 = vmatpush.msra.mxu0 0.0
      %305 = vmatpush.msra.mxu0 0.0
      %306 = vmatpush.msra.mxu0 0.0
      %307 = vmatpush.msra.mxu0 %v284
      %308 = vmatmul.f32.gmra.mxu0 %v281
      %v309 = vpop.f32.mrf.mxu0
      %v310 = vadd.f32 0.0, %v309
      %311 = vdwg.mxu0
      %312 = vmatpush.msra.mxu0 0.0
      %313 = vmatpush.msra.mxu0 0.0
      %314 = vmatpush.msra.mxu0 0.0
      %315 = vmatpush.msra.mxu0 0.0
      %316 = vmatpush.msra.mxu0 0.0
      %317 = vmatpush.msra.mxu0 0.0
      %318 = vmatpush.msra.mxu0 0.0
      %319 = vmatpush.msra.mxu0 0.0
      %320 = vmatpush.msra.mxu0 0.0
      %321 = vmatpush.msra.mxu0 0.0
      %322 = vmatpush.msra.mxu0 0.0
      %323 = vmatpush.msra.mxu0 0.0
      %324 = vmatpush.msra.mxu0 0.0
      %325 = vmatpush.msra.mxu0 0.0
      %326 = vmatpush.msra.mxu0 0.0
      %327 = vmatpush.msra.mxu0 %v286
      %328 = vmatmul.f32.gmra.mxu0 %v281
      %v329 = vpop.f32.mrf.mxu0
      %v330 = vadd.f32 0.0, %v329
      %331 = vdwg.mxu0
      %332 = vmatpush.msra.mxu0 0.0
      %333 = vmatpush.msra.mxu0 0.0
      %334 = vmatpush.msra.mxu0 0.0
      %335 = vmatpush.msra.mxu0 0.0
      %336 = vmatpush.msra.mxu0 0.0
      %337 = vmatpush.msra.mxu0 0.0
      %338 = vmatpush.msra.mxu0 0.0
      %339 = vmatpush.msra.mxu0 0.0
      %340 = vmatpush.msra.mxu0 0.0
      %341 = vmatpush.msra.mxu0 0.0
      %342 = vmatpush.msra.mxu0 0.0
      %343 = vmatpush.msra.mxu0 0.0
      %344 = vmatpush.msra.mxu0 0.0
      %345 = vmatpush.msra.mxu0 0.0
      %346 = vmatpush.msra.mxu0 0.0
      %347 = vmatpush.msra.mxu0 %v288
      %348 = vmatmul.f32.gmra.mxu0 %v281
      %v349 = vpop.f32.mrf.mxu0
      %v350 = vadd.f32 0.0, %v349
      %351 = vdwg.mxu0
      %352 = vmatpush.msra.mxu0 0.0
      %353 = vmatpush.msra.mxu0 0.0
      %354 = vmatpush.msra.mxu0 0.0
      %355 = vmatpush.msra.mxu0 0.0
      %356 = vmatpush.msra.mxu0 0.0
      %357 = vmatpush.msra.mxu0 0.0
      %358 = vmatpush.msra.mxu0 0.0
      %359 = vmatpush.msra.mxu0 0.0
      %360 = vmatpush.msra.mxu0 0.0
      %361 = vmatpush.msra.mxu0 0.0
      %362 = vmatpush.msra.mxu0 0.0
      %363 = vmatpush.msra.mxu0 0.0
      %364 = vmatpush.msra.mxu0 0.0
      %365 = vmatpush.msra.mxu0 0.0
      %366 = vmatpush.msra.mxu0 0.0
      %367 = vmatpush.msra.mxu0 %v290
      %368 = vmatmul.f32.gmra.mxu0 %v281
      %v369 = vpop.f32.mrf.mxu0
      %v370 = vadd.f32 0.0, %v369
      %371 = vdwg.mxu0
      %374 = vst [vmem:[#allocation1] ss:$2 sm:$0xff] %v262
      %s375 = scalar_lea.vmem [#allocation1], 16
      %376 = vst [vmem:[%s375] ss:$2 sm:$0xff] %v263
      %v377 = vld.sshfl [vmem:[#allocation1] sm:$0xff pattern:$0x75316420]
      %v378 = vld.sshfl [vmem:[#allocation1 + $0x8] sm:$0xff pattern:$0x75316420]
      %v379 = vld.sshfl [vmem:[#allocation1 + $0x10] sm:$0xff pattern:$0x75316420]
      %v380 = vld.sshfl [vmem:[#allocation1 + $0x18] sm:$0xff pattern:$0x75316420]
      %v382 = vsel %vm279, %v264, 0
      %v384 = vsel %vm283, %v377, 0
      %v386 = vsel %vm283, %v378, 0
      %v388 = vsel %vm283, %v379, 0
      %v390 = vsel %vm283, %v380, 0
      %392 = vmatpush.msra.mxu0 0.0
      %393 = vmatpush.msra.mxu0 0.0
      %394 = vmatpush.msra.mxu0 0.0
      %395 = vmatpush.msra.mxu0 0.0
      %396 = vmatpush.msra.mxu0 0.0
      %397 = vmatpush.msra.mxu0 0.0
      %398 = vmatpush.msra.mxu0 0.0
      %399 = vmatpush.msra.mxu0 0.0
      %400 = vmatpush.msra.mxu0 0.0
      %401 = vmatpush.msra.mxu0 0.0
      %402 = vmatpush.msra.mxu0 0.0
      %403 = vmatpush.msra.mxu0 0.0
      %404 = vmatpush.msra.mxu0 0.0
      %405 = vmatpush.msra.mxu0 0.0
      %406 = vmatpush.msra.mxu0 0.0
      %407 = vmatpush.msra.mxu0 %v384
      %408 = vmatmul.f32.gmra.mxu0 %v382
      %v409 = vpop.f32.mrf.mxu0
      %v410 = vadd.f32 %v310, %v409
      %411 = vdwg.mxu0
      %412 = vmatpush.msra.mxu0 0.0
      %413 = vmatpush.msra.mxu0 0.0
      %414 = vmatpush.msra.mxu0 0.0
      %415 = vmatpush.msra.mxu0 0.0
      %416 = vmatpush.msra.mxu0 0.0
      %417 = vmatpush.msra.mxu0 0.0
      %418 = vmatpush.msra.mxu0 0.0
      %419 = vmatpush.msra.mxu0 0.0
      %420 = vmatpush.msra.mxu0 0.0
      %421 = vmatpush.msra.mxu0 0.0
      %422 = vmatpush.msra.mxu0 0.0
      %423 = vmatpush.msra.mxu0 0.0
      %424 = vmatpush.msra.mxu0 0.0
      %425 = vmatpush.msra.mxu0 0.0
      %426 = vmatpush.msra.mxu0 0.0
      %427 = vmatpush.msra.mxu0 %v386
      %428 = vmatmul.f32.gmra.mxu0 %v382
      %v429 = vpop.f32.mrf.mxu0
      %v430 = vadd.f32 %v330, %v429
      %431 = vdwg.mxu0
      %432 = vmatpush.msra.mxu0 0.0
      %433 = vmatpush.msra.mxu0 0.0
      %434 = vmatpush.msra.mxu0 0.0
      %435 = vmatpush.msra.mxu0 0.0
      %436 = vmatpush.msra.mxu0 0.0
      %437 = vmatpush.msra.mxu0 0.0
      %438 = vmatpush.msra.mxu0 0.0
      %439 = vmatpush.msra.mxu0 0.0
      %440 = vmatpush.msra.mxu0 0.0
      %441 = vmatpush.msra.mxu0 0.0
      %442 = vmatpush.msra.mxu0 0.0
      %443 = vmatpush.msra.mxu0 0.0
      %444 = vmatpush.msra.mxu0 0.0
      %445 = vmatpush.msra.mxu0 0.0
      %446 = vmatpush.msra.mxu0 0.0
      %447 = vmatpush.msra.mxu0 %v388
      %448 = vmatmul.f32.gmra.mxu0 %v382
      %v449 = vpop.f32.mrf.mxu0
      %v450 = vadd.f32 %v350, %v449
      %451 = vdwg.mxu0
      %452 = vmatpush.msra.mxu0 0.0
      %453 = vmatpush.msra.mxu0 0.0
      %454 = vmatpush.msra.mxu0 0.0
      %455 = vmatpush.msra.mxu0 0.0
      %456 = vmatpush.msra.mxu0 0.0
      %457 = vmatpush.msra.mxu0 0.0
      %458 = vmatpush.msra.mxu0 0.0
      %459 = vmatpush.msra.mxu0 0.0
      %460 = vmatpush.msra.mxu0 0.0
      %461 = vmatpush.msra.mxu0 0.0
      %462 = vmatpush.msra.mxu0 0.0
      %463 = vmatpush.msra.mxu0 0.0
      %464 = vmatpush.msra.mxu0 0.0
      %465 = vmatpush.msra.mxu0 0.0
      %466 = vmatpush.msra.mxu0 0.0
      %467 = vmatpush.msra.mxu0 %v390
      %468 = vmatmul.f32.gmra.mxu0 %v382
      %v469 = vpop.f32.mrf.mxu0
      %v470 = vadd.f32 %v370, %v469
      %471 = vdwg.mxu0
      %s472 = scalar_lea.vmem %s251, 40
      %v473 = vld [vmem:[%s472] sm:$0xff]
      %v474 = vld [vmem:[%s472 + $0x8] sm:$0xff]
      %s475 = scalar_lea.vmem %s1, 8
      %v476 = vld [vmem:[%s475] sm:$0xf]
      %479 = vst [vmem:[#allocation1] ss:$2 sm:$0xff] %v473
      %s480 = scalar_lea.vmem [#allocation1], 16
      %481 = vst [vmem:[%s480] ss:$2 sm:$0xff] %v474
      %v482 = vld.sshfl [vmem:[#allocation1] sm:$0xff pattern:$0x75316420]
      %v483 = vld.sshfl [vmem:[#allocation1 + $0x8] sm:$0xff pattern:$0x75316420]
      %v484 = vld.sshfl [vmem:[#allocation1 + $0x10] sm:$0xff pattern:$0x75316420]
      %v485 = vld.sshfl [vmem:[#allocation1 + $0x18] sm:$0xff pattern:$0x75316420]
      %v487 = vsel %vm279, %v476, 0
      %v489 = vsel %vm283, %v482, 0
      %v491 = vsel %vm283, %v483, 0
      %v493 = vsel %vm283, %v484, 0
      %v495 = vsel %vm283, %v485, 0
      %497 = vmatpush.msra.mxu0 0.0
      %498 = vmatpush.msra.mxu0 0.0
      %499 = vmatpush.msra.mxu0 0.0
      %500 = vmatpush.msra.mxu0 0.0
      %501 = vmatpush.msra.mxu0 0.0
      %502 = vmatpush.msra.mxu0 0.0
      %503 = vmatpush.msra.mxu0 0.0
      %504 = vmatpush.msra.mxu0 0.0
      %505 = vmatpush.msra.mxu0 0.0
      %506 = vmatpush.msra.mxu0 0.0
      %507 = vmatpush.msra.mxu0 0.0
      %508 = vmatpush.msra.mxu0 0.0
      %509 = vmatpush.msra.mxu0 0.0
      %510 = vmatpush.msra.mxu0 0.0
      %511 = vmatpush.msra.mxu0 0.0
      %512 = vmatpush.msra.mxu0 %v489
      %513 = vmatmul.f32.gmra.mxu0 %v487
      %v514 = vpop.f32.mrf.mxu0
      %v515 = vadd.f32 0.0, %v514
      %516 = vdwg.mxu0
      %517 = vmatpush.msra.mxu0 0.0
      %518 = vmatpush.msra.mxu0 0.0
      %519 = vmatpush.msra.mxu0 0.0
      %520 = vmatpush.msra.mxu0 0.0
      %521 = vmatpush.msra.mxu0 0.0
      %522 = vmatpush.msra.mxu0 0.0
      %523 = vmatpush.msra.mxu0 0.0
      %524 = vmatpush.msra.mxu0 0.0
      %525 = vmatpush.msra.mxu0 0.0
      %526 = vmatpush.msra.mxu0 0.0
      %527 = vmatpush.msra.mxu0 0.0
      %528 = vmatpush.msra.mxu0 0.0
      %529 = vmatpush.msra.mxu0 0.0
      %530 = vmatpush.msra.mxu0 0.0
      %531 = vmatpush.msra.mxu0 0.0
      %532 = vmatpush.msra.mxu0 %v491
      %533 = vmatmul.f32.gmra.mxu0 %v487
      %v534 = vpop.f32.mrf.mxu0
      %v535 = vadd.f32 0.0, %v534
      %536 = vdwg.mxu0
      %537 = vmatpush.msra.mxu0 0.0
      %538 = vmatpush.msra.mxu0 0.0
      %539 = vmatpush.msra.mxu0 0.0
      %540 = vmatpush.msra.mxu0 0.0
      %541 = vmatpush.msra.mxu0 0.0
      %542 = vmatpush.msra.mxu0 0.0
      %543 = vmatpush.msra.mxu0 0.0
      %544 = vmatpush.msra.mxu0 0.0
      %545 = vmatpush.msra.mxu0 0.0
      %546 = vmatpush.msra.mxu0 0.0
      %547 = vmatpush.msra.mxu0 0.0
      %548 = vmatpush.msra.mxu0 0.0
      %549 = vmatpush.msra.mxu0 0.0
      %550 = vmatpush.msra.mxu0 0.0
      %551 = vmatpush.msra.mxu0 0.0
      %552 = vmatpush.msra.mxu0 %v493
      %553 = vmatmul.f32.gmra.mxu0 %v487
      %v554 = vpop.f32.mrf.mxu0
      %v555 = vadd.f32 0.0, %v554
      %556 = vdwg.mxu0
      %557 = vmatpush.msra.mxu0 0.0
      %558 = vmatpush.msra.mxu0 0.0
      %559 = vmatpush.msra.mxu0 0.0
      %560 = vmatpush.msra.mxu0 0.0
      %561 = vmatpush.msra.mxu0 0.0
      %562 = vmatpush.msra.mxu0 0.0
      %563 = vmatpush.msra.mxu0 0.0
      %564 = vmatpush.msra.mxu0 0.0
      %565 = vmatpush.msra.mxu0 0.0
      %566 = vmatpush.msra.mxu0 0.0
      %567 = vmatpush.msra.mxu0 0.0
      %568 = vmatpush.msra.mxu0 0.0
      %569 = vmatpush.msra.mxu0 0.0
      %570 = vmatpush.msra.mxu0 0.0
      %571 = vmatpush.msra.mxu0 0.0
      %572 = vmatpush.msra.mxu0 %v495
      %573 = vmatmul.f32.gmra.mxu0 %v487
      %v574 = vpop.f32.mrf.mxu0
      %v575 = vadd.f32 0.0, %v574
      %576 = vdwg.mxu0
      %v577 = vadd.f32 %v410, %v515
      %v578 = vadd.f32 %v430, %v535
      %v579 = vadd.f32 %v450, %v555
      %v580 = vadd.f32 %v470, %v575
      %s581 = scalar_lea.vmem %s251, 60
      %v582 = vld [vmem:[%s581] sm:$0xff]
      %v583 = vld [vmem:[%s581 + $0x8] sm:$0xff]
      %s584 = scalar_lea.vmem %s1, 12
      %v585 = vld [vmem:[%s584] sm:$0xf]
      %588 = vst [vmem:[#allocation1] ss:$2 sm:$0xff] %v582
      %s589 = scalar_lea.vmem [#allocation1], 16
      %590 = vst [vmem:[%s589] ss:$2 sm:$0xff] %v583
      %v591 = vld.sshfl [vmem:[#allocation1] sm:$0xff pattern:$0x75316420]
      %v592 = vld.sshfl [vmem:[#allocation1 + $0x8] sm:$0xff pattern:$0x75316420]
      %v593 = vld.sshfl [vmem:[#allocation1 + $0x10] sm:$0xff pattern:$0x75316420]
      %v594 = vld.sshfl [vmem:[#allocation1 + $0x18] sm:$0xff pattern:$0x75316420]
      %v596 = vsel %vm279, %v585, 0
      %v598 = vsel %vm283, %v591, 0
      %v600 = vsel %vm283, %v592, 0
      %v602 = vsel %vm283, %v593, 0
      %v604 = vsel %vm283, %v594, 0
      %606 = vmatpush.msra.mxu0 0.0
      %607 = vmatpush.msra.mxu0 0.0
      %608 = vmatpush.msra.mxu0 0.0
      %609 = vmatpush.msra.mxu0 0.0
      %610 = vmatpush.msra.mxu0 0.0
      %611 = vmatpush.msra.mxu0 0.0
      %612 = vmatpush.msra.mxu0 0.0
      %613 = vmatpush.msra.mxu0 0.0
      %614 = vmatpush.msra.mxu0 0.0
      %615 = vmatpush.msra.mxu0 0.0
      %616 = vmatpush.msra.mxu0 0.0
      %617 = vmatpush.msra.mxu0 0.0
      %618 = vmatpush.msra.mxu0 0.0
      %619 = vmatpush.msra.mxu0 0.0
      %620 = vmatpush.msra.mxu0 0.0
      %621 = vmatpush.msra.mxu0 %v598
      %622 = vmatmul.f32.gmra.mxu0 %v596
      %v623 = vpop.f32.mrf.mxu0
      %v624 = vadd.f32 0.0, %v623
      %625 = vdwg.mxu0
      %626 = vmatpush.msra.mxu0 0.0
      %627 = vmatpush.msra.mxu0 0.0
      %628 = vmatpush.msra.mxu0 0.0
      %629 = vmatpush.msra.mxu0 0.0
      %630 = vmatpush.msra.mxu0 0.0
      %631 = vmatpush.msra.mxu0 0.0
      %632 = vmatpush.msra.mxu0 0.0
      %633 = vmatpush.msra.mxu0 0.0
      %634 = vmatpush.msra.mxu0 0.0
      %635 = vmatpush.msra.mxu0 0.0
      %636 = vmatpush.msra.mxu0 0.0
      %637 = vmatpush.msra.mxu0 0.0
      %638 = vmatpush.msra.mxu0 0.0
      %639 = vmatpush.msra.mxu0 0.0
      %640 = vmatpush.msra.mxu0 0.0
      %641 = vmatpush.msra.mxu0 %v600
      %642 = vmatmul.f32.gmra.mxu0 %v596
      %v643 = vpop.f32.mrf.mxu0
      %v644 = vadd.f32 0.0, %v643
      %645 = vdwg.mxu0
      %646 = vmatpush.msra.mxu0 0.0
      %647 = vmatpush.msra.mxu0 0.0
      %648 = vmatpush.msra.mxu0 0.0
      %649 = vmatpush.msra.mxu0 0.0
      %650 = vmatpush.msra.mxu0 0.0
      %651 = vmatpush.msra.mxu0 0.0
      %652 = vmatpush.msra.mxu0 0.0
      %653 = vmatpush.msra.mxu0 0.0
      %654 = vmatpush.msra.mxu0 0.0
      %655 = vmatpush.msra.mxu0 0.0
      %656 = vmatpush.msra.mxu0 0.0
      %657 = vmatpush.msra.mxu0 0.0
      %658 = vmatpush.msra.mxu0 0.0
      %659 = vmatpush.msra.mxu0 0.0
      %660 = vmatpush.msra.mxu0 0.0
      %661 = vmatpush.msra.mxu0 %v602
      %662 = vmatmul.f32.gmra.mxu0 %v596
      %v663 = vpop.f32.mrf.mxu0
      %v664 = vadd.f32 0.0, %v663
      %665 = vdwg.mxu0
      %666 = vmatpush.msra.mxu0 0.0
      %667 = vmatpush.msra.mxu0 0.0
      %668 = vmatpush.msra.mxu0 0.0
      %669 = vmatpush.msra.mxu0 0.0
      %670 = vmatpush.msra.mxu0 0.0
      %671 = vmatpush.msra.mxu0 0.0
      %672 = vmatpush.msra.mxu0 0.0
      %673 = vmatpush.msra.mxu0 0.0
      %674 = vmatpush.msra.mxu0 0.0
      %675 = vmatpush.msra.mxu0 0.0
      %676 = vmatpush.msra.mxu0 0.0
      %677 = vmatpush.msra.mxu0 0.0
      %678 = vmatpush.msra.mxu0 0.0
      %679 = vmatpush.msra.mxu0 0.0
      %680 = vmatpush.msra.mxu0 0.0
      %681 = vmatpush.msra.mxu0 %v604
      %682 = vmatmul.f32.gmra.mxu0 %v596
      %v683 = vpop.f32.mrf.mxu0
      %v684 = vadd.f32 0.0, %v683
      %685 = vdwg.mxu0
      %v686 = vadd.f32 %v577, %v624
      %v687 = vadd.f32 %v578, %v644
      %v688 = vadd.f32 %v579, %v664
      %v689 = vadd.f32 %v580, %v684
      %s690 = scalar_lea.vmem %s251, 80
      %v691 = vld [vmem:[%s690] sm:$0xff]
      %v692 = vld [vmem:[%s690 + $0x8] sm:$0xff]
      %s693 = scalar_lea.vmem %s1, 16
      %v694 = vld [vmem:[%s693] sm:$0xf]
      %697 = vst [vmem:[#allocation1] ss:$2 sm:$0xff] %v691
      %s698 = scalar_lea.vmem [#allocation1], 16
      %699 = vst [vmem:[%s698] ss:$2 sm:$0xff] %v692
      %v700 = vld.sshfl [vmem:[#allocation1] sm:$0xff pattern:$0x75316420]
      %v701 = vld.sshfl [vmem:[#allocation1 + $0x8] sm:$0xff pattern:$0x75316420]
      %v702 = vld.sshfl [vmem:[#allocation1 + $0x10] sm:$0xff pattern:$0x75316420]
      %v703 = vld.sshfl [vmem:[#allocation1 + $0x18] sm:$0xff pattern:$0x75316420]
      %v705 = vsel %vm279, %v694, 0
      %v707 = vsel %vm283, %v700, 0
      %v709 = vsel %vm283, %v701, 0
      %v711 = vsel %vm283, %v702, 0
      %v713 = vsel %vm283, %v703, 0
      %715 = vmatpush.msra.mxu0 0.0
      %716 = vmatpush.msra.mxu0 0.0
      %717 = vmatpush.msra.mxu0 0.0
      %718 = vmatpush.msra.mxu0 0.0
      %719 = vmatpush.msra.mxu0 0.0
      %720 = vmatpush.msra.mxu0 0.0
      %721 = vmatpush.msra.mxu0 0.0
      %722 = vmatpush.msra.mxu0 0.0
      %723 = vmatpush.msra.mxu0 0.0
      %724 = vmatpush.msra.mxu0 0.0
      %725 = vmatpush.msra.mxu0 0.0
      %726 = vmatpush.msra.mxu0 0.0
      %727 = vmatpush.msra.mxu0 0.0
      %728 = vmatpush.msra.mxu0 0.0
      %729 = vmatpush.msra.mxu0 0.0
      %730 = vmatpush.msra.mxu0 %v707
      %731 = vmatmul.f32.gmra.mxu0 %v705
      %v732 = vpop.f32.mrf.mxu0
      %v733 = vadd.f32 0.0, %v732
      %734 = vdwg.mxu0
      %735 = vmatpush.msra.mxu0 0.0
      %736 = vmatpush.msra.mxu0 0.0
      %737 = vmatpush.msra.mxu0 0.0
      %738 = vmatpush.msra.mxu0 0.0
      %739 = vmatpush.msra.mxu0 0.0
      %740 = vmatpush.msra.mxu0 0.0
      %741 = vmatpush.msra.mxu0 0.0
      %742 = vmatpush.msra.mxu0 0.0
      %743 = vmatpush.msra.mxu0 0.0
      %744 = vmatpush.msra.mxu0 0.0
      %745 = vmatpush.msra.mxu0 0.0
      %746 = vmatpush.msra.mxu0 0.0
      %747 = vmatpush.msra.mxu0 0.0
      %748 = vmatpush.msra.mxu0 0.0
      %749 = vmatpush.msra.mxu0 0.0
      %750 = vmatpush.msra.mxu0 %v709
      %751 = vmatmul.f32.gmra.mxu0 %v705
      %v752 = vpop.f32.mrf.mxu0
      %v753 = vadd.f32 0.0, %v752
      %754 = vdwg.mxu0
      %755 = vmatpush.msra.mxu0 0.0
      %756 = vmatpush.msra.mxu0 0.0
      %757 = vmatpush.msra.mxu0 0.0
      %758 = vmatpush.msra.mxu0 0.0
      %759 = vmatpush.msra.mxu0 0.0
      %760 = vmatpush.msra.mxu0 0.0
      %761 = vmatpush.msra.mxu0 0.0
      %762 = vmatpush.msra.mxu0 0.0
      %763 = vmatpush.msra.mxu0 0.0
      %764 = vmatpush.msra.mxu0 0.0
      %765 = vmatpush.msra.mxu0 0.0
      %766 = vmatpush.msra.mxu0 0.0
      %767 = vmatpush.msra.mxu0 0.0
      %768 = vmatpush.msra.mxu0 0.0
      %769 = vmatpush.msra.mxu0 0.0
      %770 = vmatpush.msra.mxu0 %v711
      %771 = vmatmul.f32.gmra.mxu0 %v705
      %v772 = vpop.f32.mrf.mxu0
      %v773 = vadd.f32 0.0, %v772
      %774 = vdwg.mxu0
      %775 = vmatpush.msra.mxu0 0.0
      %776 = vmatpush.msra.mxu0 0.0
      %777 = vmatpush.msra.mxu0 0.0
      %778 = vmatpush.msra.mxu0 0.0
      %779 = vmatpush.msra.mxu0 0.0
      %780 = vmatpush.msra.mxu0 0.0
      %781 = vmatpush.msra.mxu0 0.0
      %782 = vmatpush.msra.mxu0 0.0
      %783 = vmatpush.msra.mxu0 0.0
      %784 = vmatpush.msra.mxu0 0.0
      %785 = vmatpush.msra.mxu0 0.0
      %786 = vmatpush.msra.mxu0 0.0
      %787 = vmatpush.msra.mxu0 0.0
      %788 = vmatpush.msra.mxu0 0.0
      %789 = vmatpush.msra.mxu0 0.0
      %790 = vmatpush.msra.mxu0 %v713
      %791 = vmatmul.f32.gmra.mxu0 %v705
      %v792 = vpop.f32.mrf.mxu0
      %v793 = vadd.f32 0.0, %v792
      %794 = vdwg.mxu0
      %v795 = vadd.f32 %v686, %v733
      %v796 = vadd.f32 %v687, %v753
      %v797 = vadd.f32 %v688, %v773
      %v798 = vadd.f32 %v689, %v793
      %s799 = scalar_lea.vmem %s251, 100
      %v800 = vld [vmem:[%s799] sm:$0xff]
      %v801 = vld [vmem:[%s799 + $0x8] sm:$0xff]
      %s802 = scalar_lea.vmem %s1, 20
      %v803 = vld [vmem:[%s802] sm:$0xf]
      %806 = vst [vmem:[#allocation1] ss:$2 sm:$0xff] %v800
      %s807 = scalar_lea.vmem [#allocation1], 16
      %808 = vst [vmem:[%s807] ss:$2 sm:$0xff] %v801
      %v809 = vld.sshfl [vmem:[#allocation1] sm:$0xff pattern:$0x75316420]
      %v810 = vld.sshfl [vmem:[#allocation1 + $0x8] sm:$0xff pattern:$0x75316420]
      %v811 = vld.sshfl [vmem:[#allocation1 + $0x10] sm:$0xff pattern:$0x75316420]
      %v812 = vld.sshfl [vmem:[#allocation1 + $0x18] sm:$0xff pattern:$0x75316420]
      %v814 = vsel %vm279, %v803, 0
      %v816 = vsel %vm283, %v809, 0
      %v818 = vsel %vm283, %v810, 0
      %v820 = vsel %vm283, %v811, 0
      %v822 = vsel %vm283, %v812, 0
      %824 = vmatpush.msra.mxu0 0.0
      %825 = vmatpush.msra.mxu0 0.0
      %826 = vmatpush.msra.mxu0 0.0
      %827 = vmatpush.msra.mxu0 0.0
      %828 = vmatpush.msra.mxu0 0.0
      %829 = vmatpush.msra.mxu0 0.0
      %830 = vmatpush.msra.mxu0 0.0
      %831 = vmatpush.msra.mxu0 0.0
      %832 = vmatpush.msra.mxu0 0.0
      %833 = vmatpush.msra.mxu0 0.0
      %834 = vmatpush.msra.mxu0 0.0
      %835 = vmatpush.msra.mxu0 0.0
      %836 = vmatpush.msra.mxu0 0.0
      %837 = vmatpush.msra.mxu0 0.0
      %838 = vmatpush.msra.mxu0 0.0
      %839 = vmatpush.msra.mxu0 %v816
      %840 = vmatmul.f32.gmra.mxu0 %v814
      %v841 = vpop.f32.mrf.mxu0
      %v842 = vadd.f32 0.0, %v841
      %843 = vdwg.mxu0
      %844 = vmatpush.msra.mxu0 0.0
      %845 = vmatpush.msra.mxu0 0.0
      %846 = vmatpush.msra.mxu0 0.0
      %847 = vmatpush.msra.mxu0 0.0
      %848 = vmatpush.msra.mxu0 0.0
      %849 = vmatpush.msra.mxu0 0.0
      %850 = vmatpush.msra.mxu0 0.0
      %851 = vmatpush.msra.mxu0 0.0
      %852 = vmatpush.msra.mxu0 0.0
      %853 = vmatpush.msra.mxu0 0.0
      %854 = vmatpush.msra.mxu0 0.0
      %855 = vmatpush.msra.mxu0 0.0
      %856 = vmatpush.msra.mxu0 0.0
      %857 = vmatpush.msra.mxu0 0.0
      %858 = vmatpush.msra.mxu0 0.0
      %859 = vmatpush.msra.mxu0 %v818
      %860 = vmatmul.f32.gmra.mxu0 %v814
      %v861 = vpop.f32.mrf.mxu0
      %v862 = vadd.f32 0.0, %v861
      %863 = vdwg.mxu0
      %864 = vmatpush.msra.mxu0 0.0
      %865 = vmatpush.msra.mxu0 0.0
      %866 = vmatpush.msra.mxu0 0.0
      %867 = vmatpush.msra.mxu0 0.0
      %868 = vmatpush.msra.mxu0 0.0
      %869 = vmatpush.msra.mxu0 0.0
      %870 = vmatpush.msra.mxu0 0.0
      %871 = vmatpush.msra.mxu0 0.0
      %872 = vmatpush.msra.mxu0 0.0
      %873 = vmatpush.msra.mxu0 0.0
      %874 = vmatpush.msra.mxu0 0.0
      %875 = vmatpush.msra.mxu0 0.0
      %876 = vmatpush.msra.mxu0 0.0
      %877 = vmatpush.msra.mxu0 0.0
      %878 = vmatpush.msra.mxu0 0.0
      %879 = vmatpush.msra.mxu0 %v820
      %880 = vmatmul.f32.gmra.mxu0 %v814
      %v881 = vpop.f32.mrf.mxu0
      %v882 = vadd.f32 0.0, %v881
      %883 = vdwg.mxu0
      %884 = vmatpush.msra.mxu0 0.0
      %885 = vmatpush.msra.mxu0 0.0
      %886 = vmatpush.msra.mxu0 0.0
      %887 = vmatpush.msra.mxu0 0.0
      %888 = vmatpush.msra.mxu0 0.0
      %889 = vmatpush.msra.mxu0 0.0
      %890 = vmatpush.msra.mxu0 0.0
      %891 = vmatpush.msra.mxu0 0.0
      %892 = vmatpush.msra.mxu0 0.0
      %893 = vmatpush.msra.mxu0 0.0
      %894 = vmatpush.msra.mxu0 0.0
      %895 = vmatpush.msra.mxu0 0.0
      %896 = vmatpush.msra.mxu0 0.0
      %897 = vmatpush.msra.mxu0 0.0
      %898 = vmatpush.msra.mxu0 0.0
      %899 = vmatpush.msra.mxu0 %v822
      %900 = vmatmul.f32.gmra.mxu0 %v814
      %v901 = vpop.f32.mrf.mxu0
      %v902 = vadd.f32 0.0, %v901
      %903 = vdwg.mxu0
      %v904 = vadd.f32 %v795, %v842
      %v905 = vadd.f32 %v796, %v862
      %v906 = vadd.f32 %v797, %v882
      %v907 = vadd.f32 %v798, %v902
      %v908 = vmax.f32 %v691, %v800
      %v909 = vmax.f32 %v692, %v801
      %v910 = vld [vmem:[%s251 + $0x4] sm:$0xff]
      %v911 = vld [vmem:[%s251 + $0xc] sm:$0xff]
      %s912 = scalar_lea.vmem %s1, 24
      %v913 = vld [vmem:[%s912] sm:$0xf]
      %916 = vst [vmem:[#allocation1] ss:$2 sm:$0xff] %v910
      %s917 = scalar_lea.vmem [#allocation1], 16
      %918 = vst [vmem:[%s917] ss:$2 sm:$0xff] %v911
      %v919 = vld.sshfl [vmem:[#allocation1] sm:$0xff pattern:$0x75316420]
      %v920 = vld.sshfl [vmem:[#allocation1 + $0x8] sm:$0xff pattern:$0x75316420]
      %v921 = vld.sshfl [vmem:[#allocation1 + $0x10] sm:$0xff pattern:$0x75316420]
      %v922 = vld.sshfl [vmem:[#allocation1 + $0x18] sm:$0xff pattern:$0x75316420]
      %v924 = vsel %vm279, %v913, 0
      %v926 = vsel %vm283, %v919, 0
      %v928 = vsel %vm283, %v920, 0
      %v930 = vsel %vm283, %v921, 0
      %v932 = vsel %vm283, %v922, 0
      %934 = vmatpush.msra.mxu0 0.0
      %935 = vmatpush.msra.mxu0 0.0
      %936 = vmatpush.msra.mxu0 0.0
      %937 = vmatpush.msra.mxu0 0.0
      %938 = vmatpush.msra.mxu0 0.0
      %939 = vmatpush.msra.mxu0 0.0
      %940 = vmatpush.msra.mxu0 0.0
      %941 = vmatpush.msra.mxu0 0.0
      %942 = vmatpush.msra.mxu0 0.0
      %943 = vmatpush.msra.mxu0 0.0
      %944 = vmatpush.msra.mxu0 0.0
      %945 = vmatpush.msra.mxu0 0.0
      %946 = vmatpush.msra.mxu0 0.0
      %947 = vmatpush.msra.mxu0 0.0
      %948 = vmatpush.msra.mxu0 0.0
      %949 = vmatpush.msra.mxu0 %v926
      %950 = vmatmul.f32.gmra.mxu0 %v924
      %v951 = vpop.f32.mrf.mxu0
      %v952 = vadd.f32 0.0, %v951
      %953 = vdwg.mxu0
      %954 = vmatpush.msra.mxu0 0.0
      %955 = vmatpush.msra.mxu0 0.0
      %956 = vmatpush.msra.mxu0 0.0
      %957 = vmatpush.msra.mxu0 0.0
      %958 = vmatpush.msra.mxu0 0.0
      %959 = vmatpush.msra.mxu0 0.0
      %960 = vmatpush.msra.mxu0 0.0
      %961 = vmatpush.msra.mxu0 0.0
      %962 = vmatpush.msra.mxu0 0.0
      %963 = vmatpush.msra.mxu0 0.0
      %964 = vmatpush.msra.mxu0 0.0
      %965 = vmatpush.msra.mxu0 0.0
      %966 = vmatpush.msra.mxu0 0.0
      %967 = vmatpush.msra.mxu0 0.0
      %968 = vmatpush.msra.mxu0 0.0
      %969 = vmatpush.msra.mxu0 %v928
      %970 = vmatmul.f32.gmra.mxu0 %v924
      %v971 = vpop.f32.mrf.mxu0
      %v972 = vadd.f32 0.0, %v971
      %973 = vdwg.mxu0
      %974 = vmatpush.msra.mxu0 0.0
      %975 = vmatpush.msra.mxu0 0.0
      %976 = vmatpush.msra.mxu0 0.0
      %977 = vmatpush.msra.mxu0 0.0
      %978 = vmatpush.msra.mxu0 0.0
      %979 = vmatpush.msra.mxu0 0.0
      %980 = vmatpush.msra.mxu0 0.0
      %981 = vmatpush.msra.mxu0 0.0
      %982 = vmatpush.msra.mxu0 0.0
      %983 = vmatpush.msra.mxu0 0.0
      %984 = vmatpush.msra.mxu0 0.0
      %985 = vmatpush.msra.mxu0 0.0
      %986 = vmatpush.msra.mxu0 0.0
      %987 = vmatpush.msra.mxu0 0.0
      %988 = vmatpush.msra.mxu0 0.0
      %989 = vmatpush.msra.mxu0 %v930
      %990 = vmatmul.f32.gmra.mxu0 %v924
      %v991 = vpop.f32.mrf.mxu0
      %v992 = vadd.f32 0.0, %v991
      %993 = vdwg.mxu0
      %994 = vmatpush.msra.mxu0 0.0
      %995 = vmatpush.msra.mxu0 0.0
      %996 = vmatpush.msra.mxu0 0.0
      %997 = vmatpush.msra.mxu0 0.0
      %998 = vmatpush.msra.mxu0 0.0
      %999 = vmatpush.msra.mxu0 0.0
      %1000 = vmatpush.msra.mxu0 0.0
      %1001 = vmatpush.msra.mxu0 0.0
      %1002 = vmatpush.msra.mxu0 0.0
      %1003 = vmatpush.msra.mxu0 0.0
      %1004 = vmatpush.msra.mxu0 0.0
      %1005 = vmatpush.msra.mxu0 0.0
      %1006 = vmatpush.msra.mxu0 0.0
      %1007 = vmatpush.msra.mxu0 0.0
      %1008 = vmatpush.msra.mxu0 0.0
      %1009 = vmatpush.msra.mxu0 %v932
      %1010 = vmatmul.f32.gmra.mxu0 %v924
      %v1011 = vpop.f32.mrf.mxu0
      %v1012 = vadd.f32 0.0, %v1011
      %1013 = vdwg.mxu0
      %v1014 = vadd.f32 %v904, %v952
      %v1015 = vadd.f32 %v905, %v972
      %v1016 = vadd.f32 %v906, %v992
      %v1017 = vadd.f32 %v907, %v1012
      %v1018 = vld [vmem:[%s265 + $0x4] sm:$0xff]
      %v1019 = vld [vmem:[%s265 + $0xc] sm:$0xff]
      %s1020 = scalar_lea.vmem %s1, 28
      %v1021 = vld [vmem:[%s1020] sm:$0xf]
      %1024 = vst [vmem:[#allocation1] ss:$2 sm:$0xff] %v1018
      %s1025 = scalar_lea.vmem [#allocation1], 16
      %1026 = vst [vmem:[%s1025] ss:$2 sm:$0xff] %v1019
      %v1027 = vld.sshfl [vmem:[#allocation1] sm:$0xff pattern:$0x75316420]
      %v1028 = vld.sshfl [vmem:[#allocation1 + $0x8] sm:$0xff pattern:$0x75316420]
      %v1029 = vld.sshfl [vmem:[#allocation1 + $0x10] sm:$0xff pattern:$0x75316420]
      %v1030 = vld.sshfl [vmem:[#allocation1 + $0x18] sm:$0xff pattern:$0x75316420]
      %v1032 = vsel %vm279, %v1021, 0
      %v1034 = vsel %vm283, %v1027, 0
      %v1036 = vsel %vm283, %v1028, 0
      %v1038 = vsel %vm283, %v1029, 0
      %v1040 = vsel %vm283, %v1030, 0
      %1042 = vmatpush.msra.mxu0 0.0
      %1043 = vmatpush.msra.mxu0 0.0
      %1044 = vmatpush.msra.mxu0 0.0
      %1045 = vmatpush.msra.mxu0 0.0
      %1046 = vmatpush.msra.mxu0 0.0
      %1047 = vmatpush.msra.mxu0 0.0
      %1048 = vmatpush.msra.mxu0 0.0
      %1049 = vmatpush.msra.mxu0 0.0
      %1050 = vmatpush.msra.mxu0 0.0
      %1051 = vmatpush.msra.mxu0 0.0
      %1052 = vmatpush.msra.mxu0 0.0
      %1053 = vmatpush.msra.mxu0 0.0
      %1054 = vmatpush.msra.mxu0 0.0
      %1055 = vmatpush.msra.mxu0 0.0
      %1056 = vmatpush.msra.mxu0 0.0
      %1057 = vmatpush.msra.mxu0 %v1034
      %1058 = vmatmul.f32.gmra.mxu0 %v1032
      %v1059 = vpop.f32.mrf.mxu0
      %v1060 = vadd.f32 0.0, %v1059
      %1061 = vdwg.mxu0
      %1062 = vmatpush.msra.mxu0 0.0
      %1063 = vmatpush.msra.mxu0 0.0
      %1064 = vmatpush.msra.mxu0 0.0
      %1065 = vmatpush.msra.mxu0 0.0
      %1066 = vmatpush.msra.mxu0 0.0
      %1067 = vmatpush.msra.mxu0 0.0
      %1068 = vmatpush.msra.mxu0 0.0
      %1069 = vmatpush.msra.mxu0 0.0
      %1070 = vmatpush.msra.mxu0 0.0
      %1071 = vmatpush.msra.mxu0 0.0
      %1072 = vmatpush.msra.mxu0 0.0
      %1073 = vmatpush.msra.mxu0 0.0
      %1074 = vmatpush.msra.mxu0 0.0
      %1075 = vmatpush.msra.mxu0 0.0
      %1076 = vmatpush.msra.mxu0 0.0
      %1077 = vmatpush.msra.mxu0 %v1036
      %1078 = vmatmul.f32.gmra.mxu0 %v1032
      %v1079 = vpop.f32.mrf.mxu0
      %v1080 = vadd.f32 0.0, %v1079
      %1081 = vdwg.mxu0
      %1082 = vmatpush.msra.mxu0 0.0
      %1083 = vmatpush.msra.mxu0 0.0
      %1084 = vmatpush.msra.mxu0 0.0
      %1085 = vmatpush.msra.mxu0 0.0
      %1086 = vmatpush.msra.mxu0 0.0
      %1087 = vmatpush.msra.mxu0 0.0
      %1088 = vmatpush.msra.mxu0 0.0
      %1089 = vmatpush.msra.mxu0 0.0
      %1090 = vmatpush.msra.mxu0 0.0
      %1091 = vmatpush.msra.mxu0 0.0
      %1092 = vmatpush.msra.mxu0 0.0
      %1093 = vmatpush.msra.mxu0 0.0
      %1094 = vmatpush.msra.mxu0 0.0
      %1095 = vmatpush.msra.mxu0 0.0
      %1096 = vmatpush.msra.mxu0 0.0
      %1097 = vmatpush.msra.mxu0 %v1038
      %1098 = vmatmul.f32.gmra.mxu0 %v1032
      %v1099 = vpop.f32.mrf.mxu0
      %v1100 = vadd.f32 0.0, %v1099
      %1101 = vdwg.mxu0
      %1102 = vmatpush.msra.mxu0 0.0
      %1103 = vmatpush.msra.mxu0 0.0
      %1104 = vmatpush.msra.mxu0 0.0
      %1105 = vmatpush.msra.mxu0 0.0
      %1106 = vmatpush.msra.mxu0 0.0
      %1107 = vmatpush.msra.mxu0 0.0
      %1108 = vmatpush.msra.mxu0 0.0
      %1109 = vmatpush.msra.mxu0 0.0
      %1110 = vmatpush.msra.mxu0 0.0
      %1111 = vmatpush.msra.mxu0 0.0
      %1112 = vmatpush.msra.mxu0 0.0
      %1113 = vmatpush.msra.mxu0 0.0
      %1114 = vmatpush.msra.mxu0 0.0
      %1115 = vmatpush.msra.mxu0 0.0
      %1116 = vmatpush.msra.mxu0 0.0
      %1117 = vmatpush.msra.mxu0 %v1040
      %1118 = vmatmul.f32.gmra.mxu0 %v1032
      %v1119 = vpop.f32.mrf.mxu0
      %v1120 = vadd.f32 0.0, %v1119
      %1121 = vdwg.mxu0
      %v1122 = vadd.f32 %v1014, %v1060
      %v1123 = vadd.f32 %v1015, %v1080
      %v1124 = vadd.f32 %v1016, %v1100
      %v1125 = vadd.f32 %v1017, %v1120
      %v1126 = vmax.f32 %v908, %v1018
      %v1127 = vmax.f32 %v909, %v1019
      %v1128 = vld [vmem:[%s472 + $0x4] sm:$0xff]
      %v1129 = vld [vmem:[%s472 + $0xc] sm:$0xff]
      %s1130 = scalar_lea.vmem %s1, 32
      %v1131 = vld [vmem:[%s1130] sm:$0xf]
      %1134 = vst [vmem:[#allocation1] ss:$2 sm:$0xff] %v1128
      %s1135 = scalar_lea.vmem [#allocation1], 16
      %1136 = vst [vmem:[%s1135] ss:$2 sm:$0xff] %v1129
      %v1137 = vld.sshfl [vmem:[#allocation1] sm:$0xff pattern:$0x75316420]
      %v1138 = vld.sshfl [vmem:[#allocation1 + $0x8] sm:$0xff pattern:$0x75316420]
      %v1139 = vld.sshfl [vmem:[#allocation1 + $0x10] sm:$0xff pattern:$0x75316420]
      %v1140 = vld.sshfl [vmem:[#allocation1 + $0x18] sm:$0xff pattern:$0x75316420]
      %v1142 = vsel %vm279, %v1131, 0
      %v1144 = vsel %vm283, %v1137, 0
      %v1146 = vsel %vm283, %v1138, 0
      %v1148 = vsel %vm283, %v1139, 0
      %v1150 = vsel %vm283, %v1140, 0
      %1152 = vmatpush.msra.mxu0 0.0
      %1153 = vmatpush.msra.mxu0 0.0
      %1154 = vmatpush.msra.mxu0 0.0
      %1155 = vmatpush.msra.mxu0 0.0
      %1156 = vmatpush.msra.mxu0 0.0
      %1157 = vmatpush.msra.mxu0 0.0
      %1158 = vmatpush.msra.mxu0 0.0
      %1159 = vmatpush.msra.mxu0 0.0
      %1160 = vmatpush.msra.mxu0 0.0
      %1161 = vmatpush.msra.mxu0 0.0
      %1162 = vmatpush.msra.mxu0 0.0
      %1163 = vmatpush.msra.mxu0 0.0
      %1164 = vmatpush.msra.mxu0 0.0
      %1165 = vmatpush.msra.mxu0 0.0
      %1166 = vmatpush.msra.mxu0 0.0
      %1167 = vmatpush.msra.mxu0 %v1144
      %1168 = vmatmul.f32.gmra.mxu0 %v1142
      %v1169 = vpop.f32.mrf.mxu0
      %v1170 = vadd.f32 0.0, %v1169
      %1171 = vdwg.mxu0
      %1172 = vmatpush.msra.mxu0 0.0
      %1173 = vmatpush.msra.mxu0 0.0
      %1174 = vmatpush.msra.mxu0 0.0
      %1175 = vmatpush.msra.mxu0 0.0
      %1176 = vmatpush.msra.mxu0 0.0
      %1177 = vmatpush.msra.mxu0 0.0
      %1178 = vmatpush.msra.mxu0 0.0
      %1179 = vmatpush.msra.mxu0 0.0
      %1180 = vmatpush.msra.mxu0 0.0
      %1181 = vmatpush.msra.mxu0 0.0
      %1182 = vmatpush.msra.mxu0 0.0
      %1183 = vmatpush.msra.mxu0 0.0
      %1184 = vmatpush.msra.mxu0 0.0
      %1185 = vmatpush.msra.mxu0 0.0
      %1186 = vmatpush.msra.mxu0 0.0
      %1187 = vmatpush.msra.mxu0 %v1146
      %1188 = vmatmul.f32.gmra.mxu0 %v1142
      %v1189 = vpop.f32.mrf.mxu0
      %v1190 = vadd.f32 0.0, %v1189
      %1191 = vdwg.mxu0
      %1192 = vmatpush.msra.mxu0 0.0
      %1193 = vmatpush.msra.mxu0 0.0
      %1194 = vmatpush.msra.mxu0 0.0
      %1195 = vmatpush.msra.mxu0 0.0
      %1196 = vmatpush.msra.mxu0 0.0
      %1197 = vmatpush.msra.mxu0 0.0
      %1198 = vmatpush.msra.mxu0 0.0
      %1199 = vmatpush.msra.mxu0 0.0
      %1200 = vmatpush.msra.mxu0 0.0
      %1201 = vmatpush.msra.mxu0 0.0
      %1202 = vmatpush.msra.mxu0 0.0
      %1203 = vmatpush.msra.mxu0 0.0
      %1204 = vmatpush.msra.mxu0 0.0
      %1205 = vmatpush.msra.mxu0 0.0
      %1206 = vmatpush.msra.mxu0 0.0
      %1207 = vmatpush.msra.mxu0 %v1148
      %1208 = vmatmul.f32.gmra.mxu0 %v1142
      %v1209 = vpop.f32.mrf.mxu0
      %v1210 = vadd.f32 0.0, %v1209
      %1211 = vdwg.mxu0
      %1212 = vmatpush.msra.mxu0 0.0
      %1213 = vmatpush.msra.mxu0 0.0
      %1214 = vmatpush.msra.mxu0 0.0
      %1215 = vmatpush.msra.mxu0 0.0
      %1216 = vmatpush.msra.mxu0 0.0
      %1217 = vmatpush.msra.mxu0 0.0
      %1218 = vmatpush.msra.mxu0 0.0
      %1219 = vmatpush.msra.mxu0 0.0
      %1220 = vmatpush.msra.mxu0 0.0
      %1221 = vmatpush.msra.mxu0 0.0
      %1222 = vmatpush.msra.mxu0 0.0
      %1223 = vmatpush.msra.mxu0 0.0
      %1224 = vmatpush.msra.mxu0 0.0
      %1225 = vmatpush.msra.mxu0 0.0
      %1226 = vmatpush.msra.mxu0 0.0
      %1227 = vmatpush.msra.mxu0 %v1150
      %1228 = vmatmul.f32.gmra.mxu0 %v1142
      %v1229 = vpop.f32.mrf.mxu0
      %v1230 = vadd.f32 0.0, %v1229
      %1231 = vdwg.mxu0
      %v1232 = vadd.f32 %v1122, %v1170
      %v1233 = vadd.f32 %v1123, %v1190
      %v1234 = vadd.f32 %v1124, %v1210
      %v1235 = vadd.f32 %v1125, %v1230
      %v1236 = vmax.f32 %v1126, %v1128
      %v1237 = vmax.f32 %v1127, %v1129
      %v1238 = vld [vmem:[%s2] sm:$0xf]
      %1240 = vset.pattern.permute.xlu0 0
      %1241 = vperm.xlu0 %1240, %v1238
      %v1242 = vpop.permute.xlu0 %1241
      %v1244 = vadd.f32 %v1232, %v1242
      %v1245 = vadd.f32 %v1233, %v1242
      %v1246 = vadd.f32 %v1234, %v1242
      %v1247 = vadd.f32 %v1235, %v1242
      %v1248 = vmax.f32 %v1244, 0.0
      %v1249 = vmax.f32 %v1245, 0.0
      %v1250 = vmax.f32 %v1246, 0.0
      %v1251 = vmax.f32 %v1247, 0.0
      %v1252 = vld [vmem:[%s3] sm:$0xf]
      %1254 = vset.pattern.permute.xlu0 0
      %1255 = vperm.xlu0 %1254, %v1252
      %v1256 = vpop.permute.xlu0 %1255
      %v1258 = vunpack.c.l.s4 839922192
      %v1259 = vunpack.c.0.s8 %v1258
      %v1260 = vperm.slane %v1256, %v1259
      %v1262 = vmul.f32 %v1236, %v1260
      %v1263 = vmul.f32 %v1237, %v1260
      %v1264 = vld [vmem:[%s4] sm:$0xf]
      %1266 = vset.pattern.permute.xlu0 0
      %1267 = vperm.xlu0 %1266, %v1264
      %v1268 = vpop.permute.xlu0 %1267
      %v1270 = vunpack.c.l.s4 839922192
      %v1271 = vunpack.c.0.s8 %v1270
      %v1272 = vperm.slane %v1268, %v1271
      %v1274 = vadd.f32 %v1262, %v1272
      %v1275 = vadd.f32 %v1263, %v1272
      %v1276 = vmax.f32 %v1274, 0.0
      %v1277 = vmax.f32 %v1275, 0.0
      %1278 = vst [vmem:[%s260] sm:$0xf] %v1248
      %1279 = vst [vmem:[%s260 + $0x8] sm:$0xf] %v1249
      %1280 = vst [vmem:[%s260 + $0x10] sm:$0xf] %v1250
      %1281 = vst [vmem:[%s260 + $0x18] sm:$0xf] %v1251
      %s1284 = scalar_lea.vmem [#allocation1], 1
      %1285 = vst [vmem:[%s1284] ss:$2 sm:$0xff] %v1276
      %s1286 = scalar_lea.vmem [#allocation1], 17
      %1287 = vst [vmem:[%s1286] ss:$2 sm:$0xff] %v1277
      %v1288 = vld.sshfl [vmem:[#allocation1] sm:$0xff pattern:$0x75316420]
      %v1289 = vld.sshfl [vmem:[#allocation1 + $0x8] sm:$0xff pattern:$0x75316420]
      %v1290 = vld.sshfl [vmem:[#allocation1 + $0x10] sm:$0xff pattern:$0x75316420]
      %v1291 = vld.sshfl [vmem:[#allocation1 + $0x18] sm:$0xff pattern:$0x75316420]
      %1296 = vst [vmem:[%s260] sm:$0xf0] %v1288
      %1297 = vst [vmem:[%s260 + $0x8] sm:$0xf0] %v1289
      %1298 = vst [vmem:[%s260 + $0x10] sm:$0xf0] %v1290
      %1299 = vst [vmem:[%s260 + $0x18] sm:$0xf0] %v1291
      %s1300 = smul.u32 4, %s21
      %p1301 = scmp.lt.s32.totalorder %s20, 1
      %s1302 = scalar_select %p1301, %s20, 1
      %p1303 = scmp.lt.s32.totalorder %s1300, 7
      %s1304 = scalar_select %p1303, %s1300, 7
      %s1305 = smul.addr %s1302, 8
      %s1306 = sadd.s32 %s1304, %s1305
      %s1307 = smul.addr %s1306, 8
      %s1308 = scalar_lea.vmem %s5, %s1307
      // Predicated region
      $region41: #{downsampler_block_forward.1} parent=39 // pred_check
        %p1309 = pneg %p160
      $region42: #{downsampler_block_forward.1} parent=39 // pred_check_branch
        %1311 = sbr.rel (%p1309) target = $region44
      $region43: #{downsampler_block_forward.1} parent=39 // pred_region
        %s1312 = smul.u32 4, %s21
      $region44: #{downsampler_block_forward.1} parent=39 // pred_fallthru
        _
    $region40: #{downsampler_block_forward.1} parent=5 // pred_fallthru
      _
    %p1313 = scmp.le.s32.totalorder 2, %s11
    // Predicated region
    $region45: #{downsampler_block_forward.1} parent=5 // pred_check
      %p1314 = pneg %p1313
    $region46: #{downsampler_block_forward.1} parent=5 // pred_check_branch
      %1316 = sbr.rel (%p1314) target = $region48
    $region47: #{downsampler_block_forward.1} parent=5 // pred_region
      %s1317 = ssub.s32 %s11, 2
      // Predicated region
      $region49: #{downsampler_block_forward.1} parent=47 // pred_check
        %p1318 = pneg %p166
      $region50: #{downsampler_block_forward.1} parent=47 // pred_check_branch
        %1320 = sbr.rel (%p1318) target = $region52
      $region51: #{downsampler_block_forward.1} parent=47 // pred_region
        %s1321 = smul.u32 4, %s23
        %p1322 = scmp.lt.s32.totalorder %s22, 1
        %s1323 = scalar_select %p1322, %s22, 1
        %p1324 = scmp.lt.s32.totalorder %s1321, 7
        %s1325 = scalar_select %p1324, %s1321, 7
        %s1326 = smul.addr %s1323, 8
        %s1327 = sadd.s32 %s1325, %s1326
        %s1328 = smul.addr %s1327, 8
        %s1329 = scalar_lea.vmem %s5, %s1328
      $region52: #{downsampler_block_forward.1} parent=47 // pred_fallthru
        _
    $region48: #{downsampler_block_forward.1} parent=5 // pred_fallthru
      _
  $region6: #{downsampler_block_forward.1} parent=0 // loop_footer
    %s15 = sadd.s32 1, %s11
  $region7: #{downsampler_block_forward.1} parent=0 // loop_footer_branch
    %10 = sbr.rel target = $region3
  $region8: #{downsampler_block_forward.1} parent=0 // loop_exit
    _

</llo_original>
